<compile_context>
chip_gen: v7x
topology: tpu7x:2x2x1
jax: 0.10.0
libtpu: 0.0.40
codegen_flags: <defaults>
</compile_context>

<pallas_src>
import jax
import jax.numpy as jnp
import numpy as np
from jax.experimental import pallas as pl
from jax.experimental.pallas import tpu as pltpu

EPS = 1e-5
LANES = 128
SLOT = 128          # every Linear weight lives in its own dense (128, 128) slot


# ----------------------------------------------------------------------------
# Parameter construction (PyTorch-style init) — raw, per-block.
# ----------------------------------------------------------------------------
def build_params(key, input_dim, dictionary_dim, num_blocks):
    """Raw per-block parameters with nn.Linear / nn.BatchNorm1d-style init.
    Linear weights are stored pre-transposed as (in_features, out_features)."""
    blocks = []
    in_f = input_dim

    def linear(k, fan_in, fan_out):
        k1, k2 = jax.random.split(k)
        bound = 1.0 / np.sqrt(fan_in)
        w = jax.random.uniform(k1, (fan_in, fan_out), jnp.float32, -bound, bound)
        b = jax.random.uniform(k2, (1, fan_out), jnp.float32, -bound, bound)
        return w, b

    def bn_params(k, n):
        k1, k2 = jax.random.split(k)
        # Randomized affine params (instead of gamma=1 / beta=0) so the test
        # actually exercises the gamma/beta packing paths.
        g = jax.random.uniform(k1, (1, n), jnp.float32, 0.5, 1.5)
        b = jax.random.uniform(k2, (1, n), jnp.float32, -0.5, 0.5)
        return g, b

    for layer_out, nb in zip((16, 32, 64), num_blocks):
        for _ in range(nb):
            has_proj = in_f != layer_out
            key, k1, k2, k3, k4, k5, k6 = jax.random.split(key, 7)
            blk = dict(in_f=in_f, out_f=layer_out, has_proj=has_proj,
                       fc1=linear(k1, in_f, layer_out), bn1=bn_params(k2, layer_out),
                       fc2=linear(k3, layer_out, layer_out), bn2=bn_params(k4, layer_out))
            if has_proj:
                blk["fcs"] = linear(k5, in_f, layer_out)
                blk["bns"] = bn_params(k6, layer_out)
            blocks.append(blk)
            in_f = layer_out

    key, k1 = jax.random.split(key)
    final = dict(fc=linear(k1, 64, dictionary_dim), dict_dim=dictionary_dim)
    return blocks, final


# ----------------------------------------------------------------------------
# Host-side packing into two contiguous slabs + static plan.
# ----------------------------------------------------------------------------
def pack_params(blocks, final):
    """Pack all parameters into two VMEM slabs (3 input DMAs total):
         wbuf (n_slots*128, 128) bf16 : every Linear weight in a zero-padded dense slot
         vbuf (rows, 128)       f32  : one zero-padded row per BN gamma / BN beta / final bias
       Linear biases that feed a BatchNorm are dropped (they cancel exactly in BN).
       Zero-padded gamma/beta rows keep all pad lanes exactly zero through the net."""
    w_slots, v_rows, plan_blocks = [], [], []

    def add_w(mat):
        mat = np.asarray(mat, np.float32)
        buf = np.zeros((SLOT, LANES), np.float32)
        buf[:mat.shape[0], :mat.shape[1]] = mat
        w_slots.append(buf)
        return (len(w_slots) - 1) * SLOT

    def add_v(row):
        row = np.asarray(row, np.float32).reshape(-1)
        buf = np.zeros((1, LANES), np.float32)
        buf[0, :row.shape[0]] = row
        v_rows.append(buf)
        return len(v_rows) - 1

    for blk in blocks:
        p = dict(has_proj=blk["has_proj"],
                 w1=add_w(blk["fc1"][0]),
                 bn1=(add_v(blk["bn1"][0]), add_v(blk["bn1"][1])),
                 w2=add_w(blk["fc2"][0]),
                 bn2=(add_v(blk["bn2"][0]), add_v(blk["bn2"][1])))
        if blk["has_proj"]:
            p["ws"] = add_w(blk["fcs"][0])
            p["bns"] = (add_v(blk["bns"][0]), add_v(blk["bns"][1]))
        plan_blocks.append(p)

    wl, bl = final["fc"]
    plan_final = dict(wl=add_w(wl), bl=add_v(bl), dict_dim=int(final["dict_dim"]))

    wbuf = np.concatenate(w_slots, axis=0)
    vbuf = np.concatenate(v_rows, axis=0)
    vpad = (-vbuf.shape[0]) % 8                       # f32 sublane tile = 8
    if vpad:
        vbuf = np.concatenate([vbuf, np.zeros((vpad, LANES), np.float32)], axis=0)

    return (jnp.asarray(wbuf, jnp.bfloat16),          # MXU inputs in bf16
            jnp.asarray(vbuf, jnp.float32),
            plan_blocks, plan_final)


# ----------------------------------------------------------------------------
# Pallas kernel
# ----------------------------------------------------------------------------
def _make_kernel(plan_blocks, plan_final, batch):
    inv_b = 1.0 / float(batch)

    def kernel(x_ref, w_ref, v_ref, y_ref):
        V = v_ref[...]                                # all gamma/beta/bias rows (few vregs)

        def bn(z, rows):
            # One-pass training-mode BatchNorm1d: independent sum / sum-of-squares
            # reductions (XLU), biased variance clamped at 0, single FMA apply.
            gi, bi = rows
            gamma, beta = V[gi:gi + 1, :], V[bi:bi + 1, :]
            s1 = jnp.sum(z, axis=0, keepdims=True)
            s2 = jnp.sum(z * z, axis=0, keepdims=True)
            mu = s1 * inv_b
            var = jnp.maximum(s2 * inv_b - mu * mu, 0.0)
            scale = gamma * jax.lax.rsqrt(var + EPS)
            return z * scale + (beta - mu * scale)

        def matmul(act, off):
            w = w_ref[off:off + SLOT, :]              # full dense 128x128 bf16 slot
            return jnp.dot(act.astype(jnp.bfloat16), w,
                           preferred_element_type=jnp.float32)

        cur = x_ref[...]                              # (B,128) f32, zeros beyond input_dim
        # TODO(synk): static unroll is fine for num_blocks=(1,1,1); for deep stacks convert
        # the repeated same-shape blocks to lax.fori_loop over an SMEM weight-offset table.
        for blk in plan_blocks:
            h = jnp.maximum(bn(matmul(cur, blk["w1"]), blk["bn1"]), 0.0)
            z = bn(matmul(h, blk["w2"]), blk["bn2"])
            sc = bn(matmul(cur, blk["ws"]), blk["bns"]) if blk["has_proj"] else cur
            cur = jnp.maximum(z + sc, 0.0)

        bl = plan_final["bl"]
        # Single unmasked full-width (B,128) store: dic only, at lane offset 0.
        y_ref[...] = matmul(cur, plan_final["wl"]) + V[bl:bl + 1, :]

    return kernel


def trainable_dictionary_forward(x, wbuf, vbuf, plan_blocks, plan_final,
                                 input_dim, dictionary_dim):
    batch = x.shape[0]
    x = x.astype(jnp.float32)
    # Lane-pad the input once outside the kernel so every in-kernel operand is
    # 128-lane dense (no masked loads/stores, no XLU lane shuffles inside).
    x_pad = jnp.pad(x, ((0, 0), (0, LANES - input_dim)))

    n_mats = wbuf.shape[0] // SLOT
    n_bn = sum(3 if b["has_proj"] else 2 for b in plan_blocks)
    cost = pl.CostEstimate(
        flops=2 * batch * SLOT * LANES * n_mats,
        transcendentals=n_bn * LANES,
        bytes_accessed=(x_pad.size * 4 + wbuf.size * 2 + vbuf.size * 4
                        + batch * LANES * 4))

    dic_pad = pl.pallas_call(
        _make_kernel(plan_blocks, plan_final, batch),
        out_shape=jax.ShapeDtypeStruct((batch, LANES), jnp.float32),
        in_specs=[pl.BlockSpec(memory_space=pltpu.MemorySpace.VMEM)] * 3,
        out_specs=pl.BlockSpec(memory_space=pltpu.MemorySpace.VMEM),
        compiler_params=pltpu.CompilerParams(vmem_limit_bytes=32 * 1024 * 1024),
        cost_estimate=cost,
    )(x_pad, wbuf, vbuf)

    # [ones | x | dic] assembled here; XLA fuses it with the lane slice.
    ones = jnp.ones((batch, 1), jnp.float32)
    return jnp.concatenate([ones, x, dic_pad[:, :dictionary_dim]], axis=1)


# ----------------------------------------------------------------------------
# Pure-JAX reference (same math, unpacked params, biases kept) for correctness.
# ----------------------------------------------------------------------------
def reference_forward(x, blocks, final):
    def bn(z, p):
        g, b = p
        mu = jnp.mean(z, axis=0, keepdims=True)
        var = jnp.mean((z - mu) ** 2, axis=0, keepdims=True)
        return (z - mu) * jax.lax.rsqrt(var + EPS) * g + b

    def mm(a, wb):
        w, b = wb
        return jnp.dot(a.astype(jnp.bfloat16), w.astype(jnp.bfloat16),
                       preferred_element_type=jnp.float32) + b

    x = x.astype(jnp.float32)
    cur = x
    for blk in blocks:
        out = jnp.maximum(bn(mm(cur, blk["fc1"]), blk["bn1"]), 0.0)
        out = bn(mm(out, blk["fc2"]), blk["bn2"])
        sc = bn(mm(cur, blk["fcs"]), blk["bns"]) if blk["has_proj"] else cur
        cur = jnp.maximum(out + sc, 0.0)
    dic = mm(cur, final["fc"])
    ones = jnp.ones((x.shape[0], 1), jnp.float32)
    return jnp.concatenate([ones, x, dic], axis=1)


if __name__ == "__main__":
    INPUT_DIM = 16
    DICT_DIM = 32
    NUM_BLOCKS = (1, 1, 1)
    BATCH = 16          # multiple of the bf16 sublane tile (16) for MXU M-dim occupancy

    key = jax.random.PRNGKey(0)
    key, kx, kp = jax.random.split(key, 3)
    x = jax.random.normal(kx, (BATCH, INPUT_DIM), jnp.float32)

    blocks, final = build_params(kp, INPUT_DIM, DICT_DIM, NUM_BLOCKS)
    wbuf, vbuf, plan_blocks, plan_final = pack_params(blocks, final)

    y = trainable_dictionary_forward(x, wbuf, vbuf, plan_blocks, plan_final,
                                     INPUT_DIM, DICT_DIM)
    y = jax.block_until_ready(y)

    y_ref = reference_forward(x, blocks, final)
    assert y.shape == (BATCH, 1 + INPUT_DIM + DICT_DIM)
    np.testing.assert_allclose(np.asarray(y), np.asarray(y_ref),
                               rtol=1e-2, atol=1e-2)

    # TODO(synk): PyTorch BatchNorm1d in training mode also updates running_mean /
    # running_var buffers; only the forward output is produced here.
    print("KERNEL_OK")
</pallas_src>

<mosaic_0001>
module attributes {stable_mosaic.version = 11 : i64} {
  func.func @kernel(%arg0: memref<16x128xf32, #tpu.memory_space<vmem>>, %arg1: memref<1152x128xbf16, #tpu.memory_space<vmem>>, %arg2: memref<24x128xf32, #tpu.memory_space<vmem>>, %arg3: memref<16x128xf32, #tpu.memory_space<vmem>>) attributes {dimension_semantics = [], scalar_prefetch = 0 : i64, scratch_operands = 0 : i64, tpu.core_type = #tpu.core_type<tc>} {
    %c0 = arith.constant 0 : index
    %c0_0 = arith.constant 0 : index
    %0 = vector.load %arg2[%c0, %c0_0] : memref<24x128xf32, #tpu.memory_space<vmem>>, vector<24x128xf32>
    %c0_1 = arith.constant 0 : index
    %c0_2 = arith.constant 0 : index
    %1 = vector.load %arg0[%c0_1, %c0_2] : memref<16x128xf32, #tpu.memory_space<vmem>>, vector<16x128xf32>
    %c0_3 = arith.constant 0 : index
    %c0_4 = arith.constant 0 : index
    %2 = vector.load %arg1[%c0_3, %c0_4] : memref<1152x128xbf16, #tpu.memory_space<vmem>>, vector<128x128xbf16>
    %3 = arith.truncf %1 : vector<16x128xf32> to vector<16x128xbf16>
    %cst = arith.constant dense<0.000000e+00> : vector<16x128xf32>
    %4 = tpu.matmul %3, %2, %cst {dimension_numbers = #tpu.dot_dimension_numbers<[1], [0], [0], [1], [0, 0, 1, 1], [], []>} : vector<16x128xbf16>, vector<128x128xbf16>, vector<16x128xf32> -> vector<16x128xf32>
    %5 = vector.extract_strided_slice %0 {offsets = [0, 0], sizes = [1, 128], strides = [1, 1]} : vector<24x128xf32> to vector<1x128xf32>
    %6 = vector.extract_strided_slice %0 {offsets = [1, 0], sizes = [1, 128], strides = [1, 1]} : vector<24x128xf32> to vector<1x128xf32>
    %cst_5 = arith.constant dense<0.000000e+00> : vector<128xf32>
    %7 = vector.multi_reduction <add>, %4, %cst_5 [0] : vector<16x128xf32> to vector<128xf32>
    %8 = vector.shape_cast %7 : vector<128xf32> to vector<1x128xf32>
    %9 = arith.mulf %4, %4 : vector<16x128xf32>
    %cst_6 = arith.constant dense<0.000000e+00> : vector<128xf32>
    %10 = vector.multi_reduction <add>, %9, %cst_6 [0] : vector<16x128xf32> to vector<128xf32>
    %11 = vector.shape_cast %10 : vector<128xf32> to vector<1x128xf32>
    %cst_7 = arith.constant 6.250000e-02 : f32
    %12 = vector.broadcast %cst_7 : f32 to vector<1x128xf32>
    %13 = arith.mulf %8, %12 : vector<1x128xf32>
    %cst_8 = arith.constant 6.250000e-02 : f32
    %14 = vector.broadcast %cst_8 : f32 to vector<1x128xf32>
    %15 = arith.mulf %11, %14 : vector<1x128xf32>
    %16 = arith.mulf %13, %13 : vector<1x128xf32>
    %17 = arith.subf %15, %16 : vector<1x128xf32>
    %cst_9 = arith.constant 0.000000e+00 : f32
    %18 = vector.broadcast %cst_9 : f32 to vector<1x128xf32>
    %19 = arith.maximumf %17, %18 : vector<1x128xf32>
    %cst_10 = arith.constant 9.99999974E-6 : f32
    %20 = vector.broadcast %cst_10 : f32 to vector<1x128xf32>
    %21 = arith.addf %19, %20 : vector<1x128xf32>
    %22 = math.rsqrt %21 : vector<1x128xf32>
    %23 = arith.mulf %5, %22 : vector<1x128xf32>
    %24 = vector.broadcast %23 : vector<1x128xf32> to vector<16x128xf32>
    %25 = arith.mulf %4, %24 : vector<16x128xf32>
    %26 = arith.mulf %13, %23 : vector<1x128xf32>
    %27 = arith.subf %6, %26 : vector<1x128xf32>
    %28 = vector.broadcast %27 : vector<1x128xf32> to vector<16x128xf32>
    %29 = arith.addf %25, %28 : vector<16x128xf32>
    %cst_11 = arith.constant 0.000000e+00 : f32
    %30 = vector.broadcast %cst_11 : f32 to vector<16x128xf32>
    %31 = arith.maximumf %29, %30 : vector<16x128xf32>
    %c128 = arith.constant 128 : index
    %c0_12 = arith.constant 0 : index
    %32 = vector.load %arg1[%c128, %c0_12] : memref<1152x128xbf16, #tpu.memory_space<vmem>>, vector<128x128xbf16>
    %33 = arith.truncf %31 : vector<16x128xf32> to vector<16x128xbf16>
    %cst_13 = arith.constant dense<0.000000e+00> : vector<16x128xf32>
    %34 = tpu.matmul %33, %32, %cst_13 {dimension_numbers = #tpu.dot_dimension_numbers<[1], [0], [0], [1], [0, 0, 1, 1], [], []>} : vector<16x128xbf16>, vector<128x128xbf16>, vector<16x128xf32> -> vector<16x128xf32>
    %35 = vector.extract_strided_slice %0 {offsets = [2, 0], sizes = [1, 128], strides = [1, 1]} : vector<24x128xf32> to vector<1x128xf32>
    %36 = vector.extract_strided_slice %0 {offsets = [3, 0], sizes = [1, 128], strides = [1, 1]} : vector<24x128xf32> to vector<1x128xf32>
    %cst_14 = arith.constant dense<0.000000e+00> : vector<128xf32>
    %37 = vector.multi_reduction <add>, %34, %cst_14 [0] : vector<16x128xf32> to vector<128xf32>
    %38 = vector.shape_cast %37 : vector<128xf32> to vector<1x128xf32>
    %39 = arith.mulf %34, %34 : vector<16x128xf32>
    %cst_15 = arith.constant dense<0.000000e+00> : vector<128xf32>
    %40 = vector.multi_reduction <add>, %39, %cst_15 [0] : vector<16x128xf32> to vector<128xf32>
    %41 = vector.shape_cast %40 : vector<128xf32> to vector<1x128xf32>
    %cst_16 = arith.constant 6.250000e-02 : f32
    %42 = vector.broadcast %cst_16 : f32 to vector<1x128xf32>
    %43 = arith.mulf %38, %42 : vector<1x128xf32>
    %cst_17 = arith.constant 6.250000e-02 : f32
    %44 = vector.broadcast %cst_17 : f32 to vector<1x128xf32>
    %45 = arith.mulf %41, %44 : vector<1x128xf32>
    %46 = arith.mulf %43, %43 : vector<1x128xf32>
    %47 = arith.subf %45, %46 : vector<1x128xf32>
    %cst_18 = arith.constant 0.000000e+00 : f32
    %48 = vector.broadcast %cst_18 : f32 to vector<1x128xf32>
    %49 = arith.maximumf %47, %48 : vector<1x128xf32>
    %cst_19 = arith.constant 9.99999974E-6 : f32
    %50 = vector.broadcast %cst_19 : f32 to vector<1x128xf32>
    %51 = arith.addf %49, %50 : vector<1x128xf32>
    %52 = math.rsqrt %51 : vector<1x128xf32>
    %53 = arith.mulf %35, %52 : vector<1x128xf32>
    %54 = vector.broadcast %53 : vector<1x128xf32> to vector<16x128xf32>
    %55 = arith.mulf %34, %54 : vector<16x128xf32>
    %56 = arith.mulf %43, %53 : vector<1x128xf32>
    %57 = arith.subf %36, %56 : vector<1x128xf32>
    %58 = vector.broadcast %57 : vector<1x128xf32> to vector<16x128xf32>
    %59 = arith.addf %55, %58 : vector<16x128xf32>
    %60 = arith.addf %59, %1 : vector<16x128xf32>
    %cst_20 = arith.constant 0.000000e+00 : f32
    %61 = vector.broadcast %cst_20 : f32 to vector<16x128xf32>
    %62 = arith.maximumf %60, %61 : vector<16x128xf32>
    %c256 = arith.constant 256 : index
    %c0_21 = arith.constant 0 : index
    %63 = vector.load %arg1[%c256, %c0_21] : memref<1152x128xbf16, #tpu.memory_space<vmem>>, vector<128x128xbf16>
    %64 = arith.truncf %62 : vector<16x128xf32> to vector<16x128xbf16>
    %cst_22 = arith.constant dense<0.000000e+00> : vector<16x128xf32>
    %65 = tpu.matmul %64, %63, %cst_22 {dimension_numbers = #tpu.dot_dimension_numbers<[1], [0], [0], [1], [0, 0, 1, 1], [], []>} : vector<16x128xbf16>, vector<128x128xbf16>, vector<16x128xf32> -> vector<16x128xf32>
    %66 = vector.extract_strided_slice %0 {offsets = [4, 0], sizes = [1, 128], strides = [1, 1]} : vector<24x128xf32> to vector<1x128xf32>
    %67 = vector.extract_strided_slice %0 {offsets = [5, 0], sizes = [1, 128], strides = [1, 1]} : vector<24x128xf32> to vector<1x128xf32>
    %cst_23 = arith.constant dense<0.000000e+00> : vector<128xf32>
    %68 = vector.multi_reduction <add>, %65, %cst_23 [0] : vector<16x128xf32> to vector<128xf32>
    %69 = vector.shape_cast %68 : vector<128xf32> to vector<1x128xf32>
    %70 = arith.mulf %65, %65 : vector<16x128xf32>
    %cst_24 = arith.constant dense<0.000000e+00> : vector<128xf32>
    %71 = vector.multi_reduction <add>, %70, %cst_24 [0] : vector<16x128xf32> to vector<128xf32>
    %72 = vector.shape_cast %71 : vector<128xf32> to vector<1x128xf32>
    %cst_25 = arith.constant 6.250000e-02 : f32
    %73 = vector.broadcast %cst_25 : f32 to vector<1x128xf32>
    %74 = arith.mulf %69, %73 : vector<1x128xf32>
    %cst_26 = arith.constant 6.250000e-02 : f32
    %75 = vector.broadcast %cst_26 : f32 to vector<1x128xf32>
    %76 = arith.mulf %72, %75 : vector<1x128xf32>
    %77 = arith.mulf %74, %74 : vector<1x128xf32>
    %78 = arith.subf %76, %77 : vector<1x128xf32>
    %cst_27 = arith.constant 0.000000e+00 : f32
    %79 = vector.broadcast %cst_27 : f32 to vector<1x128xf32>
    %80 = arith.maximumf %78, %79 : vector<1x128xf32>
    %cst_28 = arith.constant 9.99999974E-6 : f32
    %81 = vector.broadcast %cst_28 : f32 to vector<1x128xf32>
    %82 = arith.addf %80, %81 : vector<1x128xf32>
    %83 = math.rsqrt %82 : vector<1x128xf32>
    %84 = arith.mulf %66, %83 : vector<1x128xf32>
    %85 = vector.broadcast %84 : vector<1x128xf32> to vector<16x128xf32>
    %86 = arith.mulf %65, %85 : vector<16x128xf32>
    %87 = arith.mulf %74, %84 : vector<1x128xf32>
    %88 = arith.subf %67, %87 : vector<1x128xf32>
    %89 = vector.broadcast %88 : vector<1x128xf32> to vector<16x128xf32>
    %90 = arith.addf %86, %89 : vector<16x128xf32>
    %cst_29 = arith.constant 0.000000e+00 : f32
    %91 = vector.broadcast %cst_29 : f32 to vector<16x128xf32>
    %92 = arith.maximumf %90, %91 : vector<16x128xf32>
    %c384 = arith.constant 384 : index
    %c0_30 = arith.constant 0 : index
    %93 = vector.load %arg1[%c384, %c0_30] : memref<1152x128xbf16, #tpu.memory_space<vmem>>, vector<128x128xbf16>
    %94 = arith.truncf %92 : vector<16x128xf32> to vector<16x128xbf16>
    %cst_31 = arith.constant dense<0.000000e+00> : vector<16x128xf32>
    %95 = tpu.matmul %94, %93, %cst_31 {dimension_numbers = #tpu.dot_dimension_numbers<[1], [0], [0], [1], [0, 0, 1, 1], [], []>} : vector<16x128xbf16>, vector<128x128xbf16>, vector<16x128xf32> -> vector<16x128xf32>
    %96 = vector.extract_strided_slice %0 {offsets = [6, 0], sizes = [1, 128], strides = [1, 1]} : vector<24x128xf32> to vector<1x128xf32>
    %97 = vector.extract_strided_slice %0 {offsets = [7, 0], sizes = [1, 128], strides = [1, 1]} : vector<24x128xf32> to vector<1x128xf32>
    %cst_32 = arith.constant dense<0.000000e+00> : vector<128xf32>
    %98 = vector.multi_reduction <add>, %95, %cst_32 [0] : vector<16x128xf32> to vector<128xf32>
    %99 = vector.shape_cast %98 : vector<128xf32> to vector<1x128xf32>
    %100 = arith.mulf %95, %95 : vector<16x128xf32>
    %cst_33 = arith.constant dense<0.000000e+00> : vector<128xf32>
    %101 = vector.multi_reduction <add>, %100, %cst_33 [0] : vector<16x128xf32> to vector<128xf32>
    %102 = vector.shape_cast %101 : vector<128xf32> to vector<1x128xf32>
    %cst_34 = arith.constant 6.250000e-02 : f32
    %103 = vector.broadcast %cst_34 : f32 to vector<1x128xf32>
    %104 = arith.mulf %99, %103 : vector<1x128xf32>
    %cst_35 = arith.constant 6.250000e-02 : f32
    %105 = vector.broadcast %cst_35 : f32 to vector<1x128xf32>
    %106 = arith.mulf %102, %105 : vector<1x128xf32>
    %107 = arith.mulf %104, %104 : vector<1x128xf32>
    %108 = arith.subf %106, %107 : vector<1x128xf32>
    %cst_36 = arith.constant 0.000000e+00 : f32
    %109 = vector.broadcast %cst_36 : f32 to vector<1x128xf32>
    %110 = arith.maximumf %108, %109 : vector<1x128xf32>
    %cst_37 = arith.constant 9.99999974E-6 : f32
    %111 = vector.broadcast %cst_37 : f32 to vector<1x128xf32>
    %112 = arith.addf %110, %111 : vector<1x128xf32>
    %113 = math.rsqrt %112 : vector<1x128xf32>
    %114 = arith.mulf %96, %113 : vector<1x128xf32>
    %115 = vector.broadcast %114 : vector<1x128xf32> to vector<16x128xf32>
    %116 = arith.mulf %95, %115 : vector<16x128xf32>
    %117 = arith.mulf %104, %114 : vector<1x128xf32>
    %118 = arith.subf %97, %117 : vector<1x128xf32>
    %119 = vector.broadcast %118 : vector<1x128xf32> to vector<16x128xf32>
    %120 = arith.addf %116, %119 : vector<16x128xf32>
    %c512 = arith.constant 512 : index
    %c0_38 = arith.constant 0 : index
    %121 = vector.load %arg1[%c512, %c0_38] : memref<1152x128xbf16, #tpu.memory_space<vmem>>, vector<128x128xbf16>
    %122 = arith.truncf %62 : vector<16x128xf32> to vector<16x128xbf16>
    %cst_39 = arith.constant dense<0.000000e+00> : vector<16x128xf32>
    %123 = tpu.matmul %122, %121, %cst_39 {dimension_numbers = #tpu.dot_dimension_numbers<[1], [0], [0], [1], [0, 0, 1, 1], [], []>} : vector<16x128xbf16>, vector<128x128xbf16>, vector<16x128xf32> -> vector<16x128xf32>
    %124 = vector.extract_strided_slice %0 {offsets = [8, 0], sizes = [1, 128], strides = [1, 1]} : vector<24x128xf32> to vector<1x128xf32>
    %125 = vector.extract_strided_slice %0 {offsets = [9, 0], sizes = [1, 128], strides = [1, 1]} : vector<24x128xf32> to vector<1x128xf32>
    %cst_40 = arith.constant dense<0.000000e+00> : vector<128xf32>
    %126 = vector.multi_reduction <add>, %123, %cst_40 [0] : vector<16x128xf32> to vector<128xf32>
    %127 = vector.shape_cast %126 : vector<128xf32> to vector<1x128xf32>
    %128 = arith.mulf %123, %123 : vector<16x128xf32>
    %cst_41 = arith.constant dense<0.000000e+00> : vector<128xf32>
    %129 = vector.multi_reduction <add>, %128, %cst_41 [0] : vector<16x128xf32> to vector<128xf32>
    %130 = vector.shape_cast %129 : vector<128xf32> to vector<1x128xf32>
    %cst_42 = arith.constant 6.250000e-02 : f32
    %131 = vector.broadcast %cst_42 : f32 to vector<1x128xf32>
    %132 = arith.mulf %127, %131 : vector<1x128xf32>
    %cst_43 = arith.constant 6.250000e-02 : f32
    %133 = vector.broadcast %cst_43 : f32 to vector<1x128xf32>
    %134 = arith.mulf %130, %133 : vector<1x128xf32>
    %135 = arith.mulf %132, %132 : vector<1x128xf32>
    %136 = arith.subf %134, %135 : vector<1x128xf32>
    %cst_44 = arith.constant 0.000000e+00 : f32
    %137 = vector.broadcast %cst_44 : f32 to vector<1x128xf32>
    %138 = arith.maximumf %136, %137 : vector<1x128xf32>
    %cst_45 = arith.constant 9.99999974E-6 : f32
    %139 = vector.broadcast %cst_45 : f32 to vector<1x128xf32>
    %140 = arith.addf %138, %139 : vector<1x128xf32>
    %141 = math.rsqrt %140 : vector<1x128xf32>
    %142 = arith.mulf %124, %141 : vector<1x128xf32>
    %143 = vector.broadcast %142 : vector<1x128xf32> to vector<16x128xf32>
    %144 = arith.mulf %123, %143 : vector<16x128xf32>
    %145 = arith.mulf %132, %142 : vector<1x128xf32>
    %146 = arith.subf %125, %145 : vector<1x128xf32>
    %147 = vector.broadcast %146 : vector<1x128xf32> to vector<16x128xf32>
    %148 = arith.addf %144, %147 : vector<16x128xf32>
    %149 = arith.addf %120, %148 : vector<16x128xf32>
    %cst_46 = arith.constant 0.000000e+00 : f32
    %150 = vector.broadcast %cst_46 : f32 to vector<16x128xf32>
    %151 = arith.maximumf %149, %150 : vector<16x128xf32>
    %c640 = arith.constant 640 : index
    %c0_47 = arith.constant 0 : index
    %152 = vector.load %arg1[%c640, %c0_47] : memref<1152x128xbf16, #tpu.memory_space<vmem>>, vector<128x128xbf16>
    %153 = arith.truncf %151 : vector<16x128xf32> to vector<16x128xbf16>
    %cst_48 = arith.constant dense<0.000000e+00> : vector<16x128xf32>
    %154 = tpu.matmul %153, %152, %cst_48 {dimension_numbers = #tpu.dot_dimension_numbers<[1], [0], [0], [1], [0, 0, 1, 1], [], []>} : vector<16x128xbf16>, vector<128x128xbf16>, vector<16x128xf32> -> vector<16x128xf32>
    %155 = vector.extract_strided_slice %0 {offsets = [10, 0], sizes = [1, 128], strides = [1, 1]} : vector<24x128xf32> to vector<1x128xf32>
    %156 = vector.extract_strided_slice %0 {offsets = [11, 0], sizes = [1, 128], strides = [1, 1]} : vector<24x128xf32> to vector<1x128xf32>
    %cst_49 = arith.constant dense<0.000000e+00> : vector<128xf32>
    %157 = vector.multi_reduction <add>, %154, %cst_49 [0] : vector<16x128xf32> to vector<128xf32>
    %158 = vector.shape_cast %157 : vector<128xf32> to vector<1x128xf32>
    %159 = arith.mulf %154, %154 : vector<16x128xf32>
    %cst_50 = arith.constant dense<0.000000e+00> : vector<128xf32>
    %160 = vector.multi_reduction <add>, %159, %cst_50 [0] : vector<16x128xf32> to vector<128xf32>
    %161 = vector.shape_cast %160 : vector<128xf32> to vector<1x128xf32>
    %cst_51 = arith.constant 6.250000e-02 : f32
    %162 = vector.broadcast %cst_51 : f32 to vector<1x128xf32>
    %163 = arith.mulf %158, %162 : vector<1x128xf32>
    %cst_52 = arith.constant 6.250000e-02 : f32
    %164 = vector.broadcast %cst_52 : f32 to vector<1x128xf32>
    %165 = arith.mulf %161, %164 : vector<1x128xf32>
    %166 = arith.mulf %163, %163 : vector<1x128xf32>
    %167 = arith.subf %165, %166 : vector<1x128xf32>
    %cst_53 = arith.constant 0.000000e+00 : f32
    %168 = vector.broadcast %cst_53 : f32 to vector<1x128xf32>
    %169 = arith.maximumf %167, %168 : vector<1x128xf32>
    %cst_54 = arith.constant 9.99999974E-6 : f32
    %170 = vector.broadcast %cst_54 : f32 to vector<1x128xf32>
    %171 = arith.addf %169, %170 : vector<1x128xf32>
    %172 = math.rsqrt %171 : vector<1x128xf32>
    %173 = arith.mulf %155, %172 : vector<1x128xf32>
    %174 = vector.broadcast %173 : vector<1x128xf32> to vector<16x128xf32>
    %175 = arith.mulf %154, %174 : vector<16x128xf32>
    %176 = arith.mulf %163, %173 : vector<1x128xf32>
    %177 = arith.subf %156, %176 : vector<1x128xf32>
    %178 = vector.broadcast %177 : vector<1x128xf32> to vector<16x128xf32>
    %179 = arith.addf %175, %178 : vector<16x128xf32>
    %cst_55 = arith.constant 0.000000e+00 : f32
    %180 = vector.broadcast %cst_55 : f32 to vector<16x128xf32>
    %181 = arith.maximumf %179, %180 : vector<16x128xf32>
    %c768 = arith.constant 768 : index
    %c0_56 = arith.constant 0 : index
    %182 = vector.load %arg1[%c768, %c0_56] : memref<1152x128xbf16, #tpu.memory_space<vmem>>, vector<128x128xbf16>
    %183 = arith.truncf %181 : vector<16x128xf32> to vector<16x128xbf16>
    %cst_57 = arith.constant dense<0.000000e+00> : vector<16x128xf32>
    %184 = tpu.matmul %183, %182, %cst_57 {dimension_numbers = #tpu.dot_dimension_numbers<[1], [0], [0], [1], [0, 0, 1, 1], [], []>} : vector<16x128xbf16>, vector<128x128xbf16>, vector<16x128xf32> -> vector<16x128xf32>
    %185 = vector.extract_strided_slice %0 {offsets = [12, 0], sizes = [1, 128], strides = [1, 1]} : vector<24x128xf32> to vector<1x128xf32>
    %186 = vector.extract_strided_slice %0 {offsets = [13, 0], sizes = [1, 128], strides = [1, 1]} : vector<24x128xf32> to vector<1x128xf32>
    %cst_58 = arith.constant dense<0.000000e+00> : vector<128xf32>
    %187 = vector.multi_reduction <add>, %184, %cst_58 [0] : vector<16x128xf32> to vector<128xf32>
    %188 = vector.shape_cast %187 : vector<128xf32> to vector<1x128xf32>
    %189 = arith.mulf %184, %184 : vector<16x128xf32>
    %cst_59 = arith.constant dense<0.000000e+00> : vector<128xf32>
    %190 = vector.multi_reduction <add>, %189, %cst_59 [0] : vector<16x128xf32> to vector<128xf32>
    %191 = vector.shape_cast %190 : vector<128xf32> to vector<1x128xf32>
    %cst_60 = arith.constant 6.250000e-02 : f32
    %192 = vector.broadcast %cst_60 : f32 to vector<1x128xf32>
    %193 = arith.mulf %188, %192 : vector<1x128xf32>
    %cst_61 = arith.constant 6.250000e-02 : f32
    %194 = vector.broadcast %cst_61 : f32 to vector<1x128xf32>
    %195 = arith.mulf %191, %194 : vector<1x128xf32>
    %196 = arith.mulf %193, %193 : vector<1x128xf32>
    %197 = arith.subf %195, %196 : vector<1x128xf32>
    %cst_62 = arith.constant 0.000000e+00 : f32
    %198 = vector.broadcast %cst_62 : f32 to vector<1x128xf32>
    %199 = arith.maximumf %197, %198 : vector<1x128xf32>
    %cst_63 = arith.constant 9.99999974E-6 : f32
    %200 = vector.broadcast %cst_63 : f32 to vector<1x128xf32>
    %201 = arith.addf %199, %200 : vector<1x128xf32>
    %202 = math.rsqrt %201 : vector<1x128xf32>
    %203 = arith.mulf %185, %202 : vector<1x128xf32>
    %204 = vector.broadcast %203 : vector<1x128xf32> to vector<16x128xf32>
    %205 = arith.mulf %184, %204 : vector<16x128xf32>
    %206 = arith.mulf %193, %203 : vector<1x128xf32>
    %207 = arith.subf %186, %206 : vector<1x128xf32>
    %208 = vector.broadcast %207 : vector<1x128xf32> to vector<16x128xf32>
    %209 = arith.addf %205, %208 : vector<16x128xf32>
    %c896 = arith.constant 896 : index
    %c0_64 = arith.constant 0 : index
    %210 = vector.load %arg1[%c896, %c0_64] : memref<1152x128xbf16, #tpu.memory_space<vmem>>, vector<128x128xbf16>
    %211 = arith.truncf %151 : vector<16x128xf32> to vector<16x128xbf16>
    %cst_65 = arith.constant dense<0.000000e+00> : vector<16x128xf32>
    %212 = tpu.matmul %211, %210, %cst_65 {dimension_numbers = #tpu.dot_dimension_numbers<[1], [0], [0], [1], [0, 0, 1, 1], [], []>} : vector<16x128xbf16>, vector<128x128xbf16>, vector<16x128xf32> -> vector<16x128xf32>
    %213 = vector.extract_strided_slice %0 {offsets = [14, 0], sizes = [1, 128], strides = [1, 1]} : vector<24x128xf32> to vector<1x128xf32>
    %214 = vector.extract_strided_slice %0 {offsets = [15, 0], sizes = [1, 128], strides = [1, 1]} : vector<24x128xf32> to vector<1x128xf32>
    %cst_66 = arith.constant dense<0.000000e+00> : vector<128xf32>
    %215 = vector.multi_reduction <add>, %212, %cst_66 [0] : vector<16x128xf32> to vector<128xf32>
    %216 = vector.shape_cast %215 : vector<128xf32> to vector<1x128xf32>
    %217 = arith.mulf %212, %212 : vector<16x128xf32>
    %cst_67 = arith.constant dense<0.000000e+00> : vector<128xf32>
    %218 = vector.multi_reduction <add>, %217, %cst_67 [0] : vector<16x128xf32> to vector<128xf32>
    %219 = vector.shape_cast %218 : vector<128xf32> to vector<1x128xf32>
    %cst_68 = arith.constant 6.250000e-02 : f32
    %220 = vector.broadcast %cst_68 : f32 to vector<1x128xf32>
    %221 = arith.mulf %216, %220 : vector<1x128xf32>
    %cst_69 = arith.constant 6.250000e-02 : f32
    %222 = vector.broadcast %cst_69 : f32 to vector<1x128xf32>
    %223 = arith.mulf %219, %222 : vector<1x128xf32>
    %224 = arith.mulf %221, %221 : vector<1x128xf32>
    %225 = arith.subf %223, %224 : vector<1x128xf32>
    %cst_70 = arith.constant 0.000000e+00 : f32
    %226 = vector.broadcast %cst_70 : f32 to vector<1x128xf32>
    %227 = arith.maximumf %225, %226 : vector<1x128xf32>
    %cst_71 = arith.constant 9.99999974E-6 : f32
    %228 = vector.broadcast %cst_71 : f32 to vector<1x128xf32>
    %229 = arith.addf %227, %228 : vector<1x128xf32>
    %230 = math.rsqrt %229 : vector<1x128xf32>
    %231 = arith.mulf %213, %230 : vector<1x128xf32>
    %232 = vector.broadcast %231 : vector<1x128xf32> to vector<16x128xf32>
    %233 = arith.mulf %212, %232 : vector<16x128xf32>
    %234 = arith.mulf %221, %231 : vector<1x128xf32>
    %235 = arith.subf %214, %234 : vector<1x128xf32>
    %236 = vector.broadcast %235 : vector<1x128xf32> to vector<16x128xf32>
    %237 = arith.addf %233, %236 : vector<16x128xf32>
    %238 = arith.addf %209, %237 : vector<16x128xf32>
    %cst_72 = arith.constant 0.000000e+00 : f32
    %239 = vector.broadcast %cst_72 : f32 to vector<16x128xf32>
    %240 = arith.maximumf %238, %239 : vector<16x128xf32>
    %c1024 = arith.constant 1024 : index
    %c0_73 = arith.constant 0 : index
    %241 = vector.load %arg1[%c1024, %c0_73] : memref<1152x128xbf16, #tpu.memory_space<vmem>>, vector<128x128xbf16>
    %242 = arith.truncf %240 : vector<16x128xf32> to vector<16x128xbf16>
    %cst_74 = arith.constant dense<0.000000e+00> : vector<16x128xf32>
    %243 = tpu.matmul %242, %241, %cst_74 {dimension_numbers = #tpu.dot_dimension_numbers<[1], [0], [0], [1], [0, 0, 1, 1], [], []>} : vector<16x128xbf16>, vector<128x128xbf16>, vector<16x128xf32> -> vector<16x128xf32>
    %244 = vector.extract_strided_slice %0 {offsets = [16, 0], sizes = [1, 128], strides = [1, 1]} : vector<24x128xf32> to vector<1x128xf32>
    %245 = vector.broadcast %244 : vector<1x128xf32> to vector<16x128xf32>
    %246 = arith.addf %243, %245 : vector<16x128xf32>
    %c0_75 = arith.constant 0 : index
    %c0_76 = arith.constant 0 : index
    %247 = vector.load %arg3[%c0_75, %c0_76] : memref<16x128xf32, #tpu.memory_space<vmem>>, vector<16x128xf32>
    tpu.vector_store %arg3[%c0_75, %c0_76], %246 {strides = array<i32>} : memref<16x128xf32, #tpu.memory_space<vmem>>, vector<16x128xf32>,
    return
  }
}

</mosaic_0001>

<llo_original>
// kernel: tpu_custom_call.1
$region0: #{tpu_custom_call.1}
  #allocation0 [shape = 'u32[]', space=smem, size = 0x4, offset = 0x4, fixed_abs, tag = 'smem constant byte address 0x4 - core index']
  #allocation1 [shape = 'u32[144,128]{1,0:T(1,128)}', space=vmem, size = 0x12000, scoped, tag = 'internal scratch']
  %s0 = inlined_call_operand.hbm [shape: f32[16,128], index: 0, kind: input, shape index: {}]
  %s1 = inlined_call_operand.hbm [shape: bf16[1152,128], index: 1, kind: input, shape index: {}]
  %s2 = inlined_call_operand.hbm [shape: f32[24,128], index: 2, kind: input, shape index: {}]
  %s3 = inlined_call_operand.hbm [shape: f32[16,128], index: 3, kind: output, shape index: {}]
  %s4 = sld [smem:[#allocation0]]
  $region34: #{tpu_custom_call.1} parent=0
    _
  %s6 = ssub.s32 1, %s4
  %s7 = scalar_select 0, %s6, %s4
  $region1: #{tpu_custom_call.1} parent=0
    #allocation2 [shape = 'u8[8192]{0}', space=vmem, size = 0x2000, scoped, tag = 'input window, operand 0, single buffered']
    #allocation3 [shape = 's32[1]{0}', space=sflag, size = 0x4, scoped, tag = 'scoped memory for tpu_custom_call.1']
    #allocation4 [shape = 's32[1]{0}', space=sflag, size = 0x4, scoped, tag = 'scoped memory for tpu_custom_call.1']
    #allocation5 [shape = 'u8[294912]{0}', space=vmem, size = 0x48000, scoped, tag = 'input window, operand 1, single buffered']
    #allocation6 [shape = 's32[1]{0}', space=sflag, size = 0x4, scoped, tag = 'scoped memory for tpu_custom_call.1']
    #allocation7 [shape = 'u8[12288]{0}', space=vmem, size = 0x3000, scoped, tag = 'input window, operand 2, single buffered']
    #allocation8 [shape = 'u8[8192]{0}', space=vmem, size = 0x2000, scoped, tag = 'output window, operand 0, single buffered']
    %8 = vsyncpa [#allocation3], 0
    %9 = vsyncpa [#allocation6], 0
    %10 = vsyncpa [#allocation4], 0
    // Predicated region
    $region2: #{tpu_custom_call.1} parent=1 // pred_check
      _
    $region3: #{tpu_custom_call.1} parent=1 // pred_check_branch
      %12 = sbr.rel (0) target = $region5
    $region4: #{tpu_custom_call.1} parent=1 // pred_region
      %s14 = ssub.s32 256, 256
      %15 = vsyncadd [#allocation3], %s14
      %s16 = sshll.u32 [#allocation2], 4
      %s17 = int_to_ptr.vmem [resolvable:$true] %s16
      %22 = dma.hbm_to_vmem [thread:$0]  %s0, 256, %s17, [#allocation3], 128, 128, 8
    $region5: #{tpu_custom_call.1} parent=1 // pred_fallthru
      _
    // Predicated region
    $region6: #{tpu_custom_call.1} parent=1 // pred_check
      _
    $region7: #{tpu_custom_call.1} parent=1 // pred_check_branch
      %24 = sbr.rel (0) target = $region9
    $region8: #{tpu_custom_call.1} parent=1 // pred_region
      %s26 = ssub.s32 9216, 9216
      %27 = vsyncadd [#allocation6], %s26
      %s28 = sshll.u32 [#allocation5], 4
      %s29 = int_to_ptr.vmem [resolvable:$true] %s28
      %34 = dma.hbm_to_vmem [thread:$0]  %s1, 9216, %s29, [#allocation6], 64, 64, 4
    $region9: #{tpu_custom_call.1} parent=1 // pred_fallthru
      _
    // Predicated region
    $region10: #{tpu_custom_call.1} parent=1 // pred_check
      _
    $region11: #{tpu_custom_call.1} parent=1 // pred_check_branch
      %36 = sbr.rel (0) target = $region13
    $region12: #{tpu_custom_call.1} parent=1 // pred_region
      %s38 = ssub.s32 384, 384
      %39 = vsyncadd [#allocation6], %s38
      %s40 = sshll.u32 [#allocation7], 4
      %s41 = int_to_ptr.vmem [resolvable:$true] %s40
      %46 = dma.hbm_to_vmem [thread:$0]  %s2, 384, %s41, [#allocation6], 128, 128, 8
    $region13: #{tpu_custom_call.1} parent=1 // pred_fallthru
      _
    // Predicated region
    $region14: #{tpu_custom_call.1} parent=1 // pred_check
      _
    $region15: #{tpu_custom_call.1} parent=1 // pred_check_branch
      %48 = sbr.rel (0) target = $region17
    $region16: #{tpu_custom_call.1} parent=1 // pred_region
      %49 = dma.done [#allocation3], 256
    $region17: #{tpu_custom_call.1} parent=1 // pred_fallthru
      _
    // Predicated region
    $region18: #{tpu_custom_call.1} parent=1 // pred_check
      _
    $region19: #{tpu_custom_call.1} parent=1 // pred_check_branch
      %51 = sbr.rel (0) target = $region21
    $region20: #{tpu_custom_call.1} parent=1 // pred_region
      %52 = dma.done [#allocation6], 9216
    $region21: #{tpu_custom_call.1} parent=1 // pred_fallthru
      _
    // Predicated region
    $region22: #{tpu_custom_call.1} parent=1 // pred_check
      _
    $region23: #{tpu_custom_call.1} parent=1 // pred_check_branch
      %54 = sbr.rel (0) target = $region25
    $region24: #{tpu_custom_call.1} parent=1 // pred_region
      %55 = dma.done [#allocation6], 384
    $region25: #{tpu_custom_call.1} parent=1 // pred_fallthru
      _
    %v57 = vld [vmem:[#allocation7] sm:$0xff]
    %v58 = vld [vmem:[#allocation7 + $0x8] sm:$0xff]
    %v59 = vld [vmem:[#allocation7 + $0x10] sm:$0xff]
    %v60 = vld [vmem:[#allocation2] sm:$0xff]
    %v61 = vld [vmem:[#allocation2 + $0x8] sm:$0xff]
    %v62 = vld [vmem:[#allocation5] sm:$0xf]
    %v63 = vld [vmem:[#allocation5 + $0x4] sm:$0xf]
    %v64 = vld [vmem:[#allocation5 + $0x8] sm:$0xf]
    %v65 = vld [vmem:[#allocation5 + $0xc] sm:$0xf]
    %v66 = vld [vmem:[#allocation5 + $0x10] sm:$0xf]
    %v67 = vld [vmem:[#allocation5 + $0x14] sm:$0xf]
    %v68 = vld [vmem:[#allocation5 + $0x18] sm:$0xf]
    %v69 = vld [vmem:[#allocation5 + $0x1c] sm:$0xf]
    %v70 = vld [vmem:[#allocation5 + $0x20] sm:$0xf]
    %v71 = vld [vmem:[#allocation5 + $0x24] sm:$0xf]
    %v72 = vld [vmem:[#allocation5 + $0x28] sm:$0xf]
    %v73 = vld [vmem:[#allocation5 + $0x2c] sm:$0xf]
    %v74 = vld [vmem:[#allocation5 + $0x30] sm:$0xf]
    %v75 = vld [vmem:[#allocation5 + $0x34] sm:$0xf]
    %v76 = vld [vmem:[#allocation5 + $0x38] sm:$0xf]
    %v77 = vld [vmem:[#allocation5 + $0x3c] sm:$0xf]
    %v78 = vpack.c.bf16 %v61, %v60
    %v95 = vunpack.c.l.b16 %v62
    %v96 = vunpack.c.l.b16 %v63
    %v97 = vunpack.c.l.b16 %v64
    %v98 = vunpack.c.l.b16 %v65
    %v99 = vunpack.c.l.b16 %v66
    %v100 = vunpack.c.l.b16 %v67
    %v101 = vunpack.c.l.b16 %v68
    %v102 = vunpack.c.l.b16 %v69
    %v103 = vunpack.c.l.b16 %v70
    %v104 = vunpack.c.l.b16 %v71
    %v105 = vunpack.c.l.b16 %v72
    %v106 = vunpack.c.l.b16 %v73
    %v107 = vunpack.c.l.b16 %v74
    %v108 = vunpack.c.l.b16 %v75
    %v109 = vunpack.c.l.b16 %v76
    %v110 = vunpack.c.l.b16 %v77
    %v111 = vpack.c.b16 %v96, %v95
    %v112 = vpack.c.b16 %v98, %v97
    %v113 = vpack.c.b16 %v100, %v99
    %v114 = vpack.c.b16 %v102, %v101
    %v115 = vpack.c.b16 %v104, %v103
    %v116 = vpack.c.b16 %v106, %v105
    %v117 = vpack.c.b16 %v108, %v107
    %v118 = vpack.c.b16 %v110, %v109
    %127 = vmatprep.subr.bf16.mxu0 0
    %128 = vmatpush1.bf16.msra.mxu0 %v111
    %129 = vmatprep.subr.bf16.mxu0 0
    %130 = vmatpush1.bf16.msra.mxu0 %v112
    %131 = vmatprep.subr.bf16.mxu0 0
    %132 = vmatpush1.bf16.msra.mxu0 %v113
    %133 = vmatprep.subr.bf16.mxu0 0
    %134 = vmatpush1.bf16.msra.mxu0 %v114
    %135 = vmatprep.subr.bf16.mxu0 0
    %136 = vmatpush1.bf16.msra.mxu0 %v115
    %137 = vmatprep.subr.bf16.mxu0 0
    %138 = vmatpush1.bf16.msra.mxu0 %v116
    %139 = vmatprep.subr.bf16.mxu0 0
    %140 = vmatpush1.bf16.msra.mxu0 %v117
    %141 = vmatprep.subr.bf16.mxu0 0
    %142 = vmatpush1.bf16.msra.mxu0 %v118
    %143 = vmatprep.subr.bf16.mxu0 0
    %144 = vmatpush1.bf16.msra.mxu0 0
    %145 = vmatprep.subr.bf16.mxu0 0
    %146 = vmatpush1.bf16.msra.mxu0 0
    %147 = vmatprep.subr.bf16.mxu0 0
    %148 = vmatpush1.bf16.msra.mxu0 0
    %149 = vmatprep.subr.bf16.mxu0 0
    %150 = vmatpush1.bf16.msra.mxu0 0
    %151 = vmatprep.subr.bf16.mxu0 0
    %152 = vmatpush1.bf16.msra.mxu0 0
    %153 = vmatprep.subr.bf16.mxu0 0
    %154 = vmatpush1.bf16.msra.mxu0 0
    %155 = vmatprep.subr.bf16.mxu0 0
    %156 = vmatpush1.bf16.msra.mxu0 0
    %157 = vmatprep.subr.bf16.mxu0 0
    %158 = vmatpush1.bf16.msra.mxu0 0
    %159 = vmatprep.mubr.bf16.mxu0 0
    %160 = vmatmul.mubr.bf16.gmra.mrb[0].mxu0 %v78
    %v161 = vpop.f32.mrb[0].mxu0
    %v162 = vadd.f32 0.0, %v161
    %v163 = vpop.f32.mrb[0].mxu0
    %v164 = vpop.f32.mrb[0].mxu0
    %v165 = vadd.f32 0.0, %v164
    %v166 = vpop.f32.mrb[0].mxu0
    %167 = vdwg.mxu0
    %v168 = vadd.f32 %v162, %v165
    %v169 = vrot.slane %v168, 4
    %v170 = vadd.f32 %v168, %v169
    %v171 = vrot.slane %v170, 2
    %v172 = vadd.f32 %v170, %v171
    %v173 = vrot.slane %v172, 1
    %v174 = vadd.f32 %v172, %v173
    %v175 = vmul.f32 %v162, %v162
    %v176 = vmul.f32 %v165, %v165
    %v177 = vadd.f32 %v175, %v176
    %v178 = vrot.slane %v177, 4
    %v179 = vadd.f32 %v177, %v178
    %v180 = vrot.slane %v179, 2
    %v181 = vadd.f32 %v179, %v180
    %v182 = vrot.slane %v181, 1
    %v183 = vadd.f32 %v181, %v182
    %v184 = vmul.f32 %v174, 0.0625
    %v185 = vmul.f32 %v183, 0.0625
    %v186 = vmul.f32 %v184, %v184
    %v187 = vsub.f32 %v185, %v186
    %v188 = vmax.f32 %v187, 0.0
    %v189 = vadd.f32 %v188, 1e-05
    %v190 = vrsqrt.pop %v189
    %v191 = vmul.f32 %v57, %v190
    %v192 = vlaneseq
    %v193 = vshrl.u32 %v192, 7
    %v194 = vsub.s32 0, %v193
    %v195 = vrot.slane %v191, %v194
    %v196 = vmul.f32 %v162, %v195
    %v197 = vmul.f32 %v165, %v195
    %v198 = vmul.f32 %v184, %v191
    %v200 = vrot.slane %v198, 7
    %v202 = vsub.f32 %v57, %v200
    %v203 = vlaneseq
    %v204 = vshrl.u32 %v203, 7
    %v205 = vsub.s32 1, %v204
    %v206 = vrot.slane %v202, %v205
    %v207 = vadd.f32 %v196, %v206
    %v208 = vadd.f32 %v197, %v206
    %v209 = vmax.f32 %v207, 0.0
    %v210 = vmax.f32 %v208, 0.0
    %v211 = vld [vmem:[#allocation5 + $0x40] sm:$0xf]
    %v212 = vld [vmem:[#allocation5 + $0x44] sm:$0xf]
    %v213 = vld [vmem:[#allocation5 + $0x48] sm:$0xf]
    %v214 = vld [vmem:[#allocation5 + $0x4c] sm:$0xf]
    %v215 = vld [vmem:[#allocation5 + $0x50] sm:$0xf]
    %v216 = vld [vmem:[#allocation5 + $0x54] sm:$0xf]
    %v217 = vld [vmem:[#allocation5 + $0x58] sm:$0xf]
    %v218 = vld [vmem:[#allocation5 + $0x5c] sm:$0xf]
    %v219 = vld [vmem:[#allocation5 + $0x60] sm:$0xf]
    %v220 = vld [vmem:[#allocation5 + $0x64] sm:$0xf]
    %v221 = vld [vmem:[#allocation5 + $0x68] sm:$0xf]
    %v222 = vld [vmem:[#allocation5 + $0x6c] sm:$0xf]
    %v223 = vld [vmem:[#allocation5 + $0x70] sm:$0xf]
    %v224 = vld [vmem:[#allocation5 + $0x74] sm:$0xf]
    %v225 = vld [vmem:[#allocation5 + $0x78] sm:$0xf]
    %v226 = vld [vmem:[#allocation5 + $0x7c] sm:$0xf]
    %v227 = vpack.c.bf16 %v210, %v209
    %v244 = vunpack.c.l.b16 %v211
    %v245 = vunpack.c.l.b16 %v212
    %v246 = vunpack.c.l.b16 %v213
    %v247 = vunpack.c.l.b16 %v214
    %v248 = vunpack.c.l.b16 %v215
    %v249 = vunpack.c.l.b16 %v216
    %v250 = vunpack.c.l.b16 %v217
    %v251 = vunpack.c.l.b16 %v218
    %v252 = vunpack.c.l.b16 %v219
    %v253 = vunpack.c.l.b16 %v220
    %v254 = vunpack.c.l.b16 %v221
    %v255 = vunpack.c.l.b16 %v222
    %v256 = vunpack.c.l.b16 %v223
    %v257 = vunpack.c.l.b16 %v224
    %v258 = vunpack.c.l.b16 %v225
    %v259 = vunpack.c.l.b16 %v226
    %v260 = vpack.c.b16 %v245, %v244
    %v261 = vpack.c.b16 %v247, %v246
    %v262 = vpack.c.b16 %v249, %v248
    %v263 = vpack.c.b16 %v251, %v250
    %v264 = vpack.c.b16 %v253, %v252
    %v265 = vpack.c.b16 %v255, %v254
    %v266 = vpack.c.b16 %v257, %v256
    %v267 = vpack.c.b16 %v259, %v258
    %276 = vmatprep.subr.bf16.mxu0 0
    %277 = vmatpush1.bf16.msra.mxu0 %v260
    %278 = vmatprep.subr.bf16.mxu0 0
    %279 = vmatpush1.bf16.msra.mxu0 %v261
    %280 = vmatprep.subr.bf16.mxu0 0
    %281 = vmatpush1.bf16.msra.mxu0 %v262
    %282 = vmatprep.subr.bf16.mxu0 0
    %283 = vmatpush1.bf16.msra.mxu0 %v263
    %284 = vmatprep.subr.bf16.mxu0 0
    %285 = vmatpush1.bf16.msra.mxu0 %v264
    %286 = vmatprep.subr.bf16.mxu0 0
    %287 = vmatpush1.bf16.msra.mxu0 %v265
    %288 = vmatprep.subr.bf16.mxu0 0
    %289 = vmatpush1.bf16.msra.mxu0 %v266
    %290 = vmatprep.subr.bf16.mxu0 0
    %291 = vmatpush1.bf16.msra.mxu0 %v267
    %292 = vmatprep.subr.bf16.mxu0 0
    %293 = vmatpush1.bf16.msra.mxu0 0
    %294 = vmatprep.subr.bf16.mxu0 0
    %295 = vmatpush1.bf16.msra.mxu0 0
    %296 = vmatprep.subr.bf16.mxu0 0
    %297 = vmatpush1.bf16.msra.mxu0 0
    %298 = vmatprep.subr.bf16.mxu0 0
    %299 = vmatpush1.bf16.msra.mxu0 0
    %300 = vmatprep.subr.bf16.mxu0 0
    %301 = vmatpush1.bf16.msra.mxu0 0
    %302 = vmatprep.subr.bf16.mxu0 0
    %303 = vmatpush1.bf16.msra.mxu0 0
    %304 = vmatprep.subr.bf16.mxu0 0
    %305 = vmatpush1.bf16.msra.mxu0 0
    %306 = vmatprep.subr.bf16.mxu0 0
    %307 = vmatpush1.bf16.msra.mxu0 0
    %308 = vmatprep.mubr.bf16.mxu0 0
    %309 = vmatmul.mubr.bf16.gmra.mrb[0].mxu0 %v227
    %v310 = vpop.f32.mrb[0].mxu0
    %v311 = vadd.f32 0.0, %v310
    %v312 = vpop.f32.mrb[0].mxu0
    %v313 = vpop.f32.mrb[0].mxu0
    %v314 = vadd.f32 0.0, %v313
    %v315 = vpop.f32.mrb[0].mxu0
    %316 = vdwg.mxu0
    %v317 = vadd.f32 %v311, %v314
    %v318 = vrot.slane %v317, 4
    %v319 = vadd.f32 %v317, %v318
    %v320 = vrot.slane %v319, 2
    %v321 = vadd.f32 %v319, %v320
    %v322 = vrot.slane %v321, 1
    %v323 = vadd.f32 %v321, %v322
    %v324 = vmul.f32 %v311, %v311
    %v325 = vmul.f32 %v314, %v314
    %v326 = vadd.f32 %v324, %v325
    %v327 = vrot.slane %v326, 4
    %v328 = vadd.f32 %v326, %v327
    %v329 = vrot.slane %v328, 2
    %v330 = vadd.f32 %v328, %v329
    %v331 = vrot.slane %v330, 1
    %v332 = vadd.f32 %v330, %v331
    %v333 = vmul.f32 %v323, 0.0625
    %v334 = vmul.f32 %v332, 0.0625
    %v335 = vmul.f32 %v333, %v333
    %v336 = vsub.f32 %v334, %v335
    %v337 = vmax.f32 %v336, 0.0
    %v338 = vadd.f32 %v337, 1e-05
    %v339 = vrsqrt.pop %v338
    %v340 = vmul.f32 %v57, %v339
    %v341 = vlaneseq
    %v342 = vshrl.u32 %v341, 7
    %v343 = vsub.s32 2, %v342
    %v344 = vrot.slane %v340, %v343
    %v345 = vmul.f32 %v311, %v344
    %v346 = vmul.f32 %v314, %v344
    %v347 = vmul.f32 %v333, %v340
    %v349 = vrot.slane %v347, 7
    %v351 = vsub.f32 %v57, %v349
    %v352 = vlaneseq
    %v353 = vshrl.u32 %v352, 7
    %v354 = vsub.s32 3, %v353
    %v355 = vrot.slane %v351, %v354
    %v356 = vadd.f32 %v345, %v355
    %v357 = vadd.f32 %v346, %v355
    %v358 = vadd.f32 %v356, %v60
    %v359 = vadd.f32 %v357, %v61
    %v360 = vmax.f32 %v358, 0.0
    %v361 = vmax.f32 %v359, 0.0
    %v362 = vld [vmem:[#allocation5 + $0x80] sm:$0xf]
    %v363 = vld [vmem:[#allocation5 + $0x84] sm:$0xf]
    %v364 = vld [vmem:[#allocation5 + $0x88] sm:$0xf]
    %v365 = vld [vmem:[#allocation5 + $0x8c] sm:$0xf]
    %v366 = vld [vmem:[#allocation5 + $0x90] sm:$0xf]
    %v367 = vld [vmem:[#allocation5 + $0x94] sm:$0xf]
    %v368 = vld [vmem:[#allocation5 + $0x98] sm:$0xf]
    %v369 = vld [vmem:[#allocation5 + $0x9c] sm:$0xf]
    %v370 = vld [vmem:[#allocation5 + $0xa0] sm:$0xf]
    %v371 = vld [vmem:[#allocation5 + $0xa4] sm:$0xf]
    %v372 = vld [vmem:[#allocation5 + $0xa8] sm:$0xf]
    %v373 = vld [vmem:[#allocation5 + $0xac] sm:$0xf]
    %v374 = vld [vmem:[#allocation5 + $0xb0] sm:$0xf]
    %v375 = vld [vmem:[#allocation5 + $0xb4] sm:$0xf]
    %v376 = vld [vmem:[#allocation5 + $0xb8] sm:$0xf]
    %v377 = vld [vmem:[#allocation5 + $0xbc] sm:$0xf]
    %v378 = vpack.c.bf16 %v361, %v360
    %v395 = vunpack.c.l.b16 %v362
    %v396 = vunpack.c.l.b16 %v363
    %v397 = vunpack.c.l.b16 %v364
    %v398 = vunpack.c.l.b16 %v365
    %v399 = vunpack.c.l.b16 %v366
    %v400 = vunpack.c.l.b16 %v367
    %v401 = vunpack.c.l.b16 %v368
    %v402 = vunpack.c.l.b16 %v369
    %v403 = vunpack.c.l.b16 %v370
    %v404 = vunpack.c.l.b16 %v371
    %v405 = vunpack.c.l.b16 %v372
    %v406 = vunpack.c.l.b16 %v373
    %v407 = vunpack.c.l.b16 %v374
    %v408 = vunpack.c.l.b16 %v375
    %v409 = vunpack.c.l.b16 %v376
    %v410 = vunpack.c.l.b16 %v377
    %v411 = vpack.c.b16 %v396, %v395
    %v412 = vpack.c.b16 %v398, %v397
    %v413 = vpack.c.b16 %v400, %v399
    %v414 = vpack.c.b16 %v402, %v401
    %v415 = vpack.c.b16 %v404, %v403
    %v416 = vpack.c.b16 %v406, %v405
    %v417 = vpack.c.b16 %v408, %v407
    %v418 = vpack.c.b16 %v410, %v409
    %427 = vmatprep.subr.bf16.mxu0 0
    %428 = vmatpush1.bf16.msra.mxu0 %v411
    %429 = vmatprep.subr.bf16.mxu0 0
    %430 = vmatpush1.bf16.msra.mxu0 %v412
    %431 = vmatprep.subr.bf16.mxu0 0
    %432 = vmatpush1.bf16.msra.mxu0 %v413
    %433 = vmatprep.subr.bf16.mxu0 0
    %434 = vmatpush1.bf16.msra.mxu0 %v414
    %435 = vmatprep.subr.bf16.mxu0 0
    %436 = vmatpush1.bf16.msra.mxu0 %v415
    %437 = vmatprep.subr.bf16.mxu0 0
    %438 = vmatpush1.bf16.msra.mxu0 %v416
    %439 = vmatprep.subr.bf16.mxu0 0
    %440 = vmatpush1.bf16.msra.mxu0 %v417
    %441 = vmatprep.subr.bf16.mxu0 0
    %442 = vmatpush1.bf16.msra.mxu0 %v418
    %443 = vmatprep.subr.bf16.mxu0 0
    %444 = vmatpush1.bf16.msra.mxu0 0
    %445 = vmatprep.subr.bf16.mxu0 0
    %446 = vmatpush1.bf16.msra.mxu0 0
    %447 = vmatprep.subr.bf16.mxu0 0
    %448 = vmatpush1.bf16.msra.mxu0 0
    %449 = vmatprep.subr.bf16.mxu0 0
    %450 = vmatpush1.bf16.msra.mxu0 0
    %451 = vmatprep.subr.bf16.mxu0 0
    %452 = vmatpush1.bf16.msra.mxu0 0
    %453 = vmatprep.subr.bf16.mxu0 0
    %454 = vmatpush1.bf16.msra.mxu0 0
    %455 = vmatprep.subr.bf16.mxu0 0
    %456 = vmatpush1.bf16.msra.mxu0 0
    %457 = vmatprep.subr.bf16.mxu0 0
    %458 = vmatpush1.bf16.msra.mxu0 0
    %459 = vmatprep.mubr.bf16.mxu0 0
    %460 = vmatmul.mubr.bf16.gmra.mrb[0].mxu0 %v378
    %v461 = vpop.f32.mrb[0].mxu0
    %v462 = vadd.f32 0.0, %v461
    %v463 = vpop.f32.mrb[0].mxu0
    %v464 = vpop.f32.mrb[0].mxu0
    %v465 = vadd.f32 0.0, %v464
    %v466 = vpop.f32.mrb[0].mxu0
    %467 = vdwg.mxu0
    %v468 = vadd.f32 %v462, %v465
    %v469 = vrot.slane %v468, 4
    %v470 = vadd.f32 %v468, %v469
    %v471 = vrot.slane %v470, 2
    %v472 = vadd.f32 %v470, %v471
    %v473 = vrot.slane %v472, 1
    %v474 = vadd.f32 %v472, %v473
    %v475 = vmul.f32 %v462, %v462
    %v476 = vmul.f32 %v465, %v465
    %v477 = vadd.f32 %v475, %v476
    %v478 = vrot.slane %v477, 4
    %v479 = vadd.f32 %v477, %v478
    %v480 = vrot.slane %v479, 2
    %v481 = vadd.f32 %v479, %v480
    %v482 = vrot.slane %v481, 1
    %v483 = vadd.f32 %v481, %v482
    %v484 = vmul.f32 %v474, 0.0625
    %v485 = vmul.f32 %v483, 0.0625
    %v486 = vmul.f32 %v484, %v484
    %v487 = vsub.f32 %v485, %v486
    %v488 = vmax.f32 %v487, 0.0
    %v489 = vadd.f32 %v488, 1e-05
    %v490 = vrsqrt.pop %v489
    %v491 = vmul.f32 %v57, %v490
    %v492 = vlaneseq
    %v493 = vshrl.u32 %v492, 7
    %v494 = vsub.s32 4, %v493
    %v495 = vrot.slane %v491, %v494
    %v496 = vmul.f32 %v462, %v495
    %v497 = vmul.f32 %v465, %v495
    %v498 = vmul.f32 %v484, %v491
    %v500 = vrot.slane %v498, 7
    %v502 = vsub.f32 %v57, %v500
    %v503 = vlaneseq
    %v504 = vshrl.u32 %v503, 7
    %v505 = vsub.s32 5, %v504
    %v506 = vrot.slane %v502, %v505
    %v507 = vadd.f32 %v496, %v506
    %v508 = vadd.f32 %v497, %v506
    %v509 = vmax.f32 %v507, 0.0
    %v510 = vmax.f32 %v508, 0.0
    %v511 = vld [vmem:[#allocation5 + $0xc0] sm:$0xf]
    %v512 = vld [vmem:[#allocation5 + $0xc4] sm:$0xf]
    %v513 = vld [vmem:[#allocation5 + $0xc8] sm:$0xf]
    %v514 = vld [vmem:[#allocation5 + $0xcc] sm:$0xf]
    %v515 = vld [vmem:[#allocation5 + $0xd0] sm:$0xf]
    %v516 = vld [vmem:[#allocation5 + $0xd4] sm:$0xf]
    %v517 = vld [vmem:[#allocation5 + $0xd8] sm:$0xf]
    %v518 = vld [vmem:[#allocation5 + $0xdc] sm:$0xf]
    %v519 = vld [vmem:[#allocation5 + $0xe0] sm:$0xf]
    %v520 = vld [vmem:[#allocation5 + $0xe4] sm:$0xf]
    %v521 = vld [vmem:[#allocation5 + $0xe8] sm:$0xf]
    %v522 = vld [vmem:[#allocation5 + $0xec] sm:$0xf]
    %v523 = vld [vmem:[#allocation5 + $0xf0] sm:$0xf]
    %v524 = vld [vmem:[#allocation5 + $0xf4] sm:$0xf]
    %v525 = vld [vmem:[#allocation5 + $0xf8] sm:$0xf]
    %v526 = vld [vmem:[#allocation5 + $0xfc] sm:$0xf]
    %v527 = vpack.c.bf16 %v510, %v509
    %v544 = vunpack.c.l.b16 %v511
    %v545 = vunpack.c.l.b16 %v512
    %v546 = vunpack.c.l.b16 %v513
    %v547 = vunpack.c.l.b16 %v514
    %v548 = vunpack.c.l.b16 %v515
    %v549 = vunpack.c.l.b16 %v516
    %v550 = vunpack.c.l.b16 %v517
    %v551 = vunpack.c.l.b16 %v518
    %v552 = vunpack.c.l.b16 %v519
    %v553 = vunpack.c.l.b16 %v520
    %v554 = vunpack.c.l.b16 %v521
    %v555 = vunpack.c.l.b16 %v522
    %v556 = vunpack.c.l.b16 %v523
    %v557 = vunpack.c.l.b16 %v524
    %v558 = vunpack.c.l.b16 %v525
    %v559 = vunpack.c.l.b16 %v526
    %v560 = vpack.c.b16 %v545, %v544
    %v561 = vpack.c.b16 %v547, %v546
    %v562 = vpack.c.b16 %v549, %v548
    %v563 = vpack.c.b16 %v551, %v550
    %v564 = vpack.c.b16 %v553, %v552
    %v565 = vpack.c.b16 %v555, %v554
    %v566 = vpack.c.b16 %v557, %v556
    %v567 = vpack.c.b16 %v559, %v558
    %576 = vmatprep.subr.bf16.mxu0 0
    %577 = vmatpush1.bf16.msra.mxu0 %v560
    %578 = vmatprep.subr.bf16.mxu0 0
    %579 = vmatpush1.bf16.msra.mxu0 %v561
    %580 = vmatprep.subr.bf16.mxu0 0
    %581 = vmatpush1.bf16.msra.mxu0 %v562
    %582 = vmatprep.subr.bf16.mxu0 0
    %583 = vmatpush1.bf16.msra.mxu0 %v563
    %584 = vmatprep.subr.bf16.mxu0 0
    %585 = vmatpush1.bf16.msra.mxu0 %v564
    %586 = vmatprep.subr.bf16.mxu0 0
    %587 = vmatpush1.bf16.msra.mxu0 %v565
    %588 = vmatprep.subr.bf16.mxu0 0
    %589 = vmatpush1.bf16.msra.mxu0 %v566
    %590 = vmatprep.subr.bf16.mxu0 0
    %591 = vmatpush1.bf16.msra.mxu0 %v567
    %592 = vmatprep.subr.bf16.mxu0 0
    %593 = vmatpush1.bf16.msra.mxu0 0
    %594 = vmatprep.subr.bf16.mxu0 0
    %595 = vmatpush1.bf16.msra.mxu0 0
    %596 = vmatprep.subr.bf16.mxu0 0
    %597 = vmatpush1.bf16.msra.mxu0 0
    %598 = vmatprep.subr.bf16.mxu0 0
    %599 = vmatpush1.bf16.msra.mxu0 0
    %600 = vmatprep.subr.bf16.mxu0 0
    %601 = vmatpush1.bf16.msra.mxu0 0
    %602 = vmatprep.subr.bf16.mxu0 0
    %603 = vmatpush1.bf16.msra.mxu0 0
    %604 = vmatprep.subr.bf16.mxu0 0
    %605 = vmatpush1.bf16.msra.mxu0 0
    %606 = vmatprep.subr.bf16.mxu0 0
    %607 = vmatpush1.bf16.msra.mxu0 0
    %608 = vmatprep.mubr.bf16.mxu0 0
    %609 = vmatmul.mubr.bf16.gmra.mrb[0].mxu0 %v527
    %v610 = vpop.f32.mrb[0].mxu0
    %v611 = vadd.f32 0.0, %v610
    %v612 = vpop.f32.mrb[0].mxu0
    %v613 = vpop.f32.mrb[0].mxu0
    %v614 = vadd.f32 0.0, %v613
    %v615 = vpop.f32.mrb[0].mxu0
    %616 = vdwg.mxu0
    %v617 = vadd.f32 %v611, %v614
    %v618 = vrot.slane %v617, 4
    %v619 = vadd.f32 %v617, %v618
    %v620 = vrot.slane %v619, 2
    %v621 = vadd.f32 %v619, %v620
    %v622 = vrot.slane %v621, 1
    %v623 = vadd.f32 %v621, %v622
    %v624 = vmul.f32 %v611, %v611
    %v625 = vmul.f32 %v614, %v614
    %v626 = vadd.f32 %v624, %v625
    %v627 = vrot.slane %v626, 4
    %v628 = vadd.f32 %v626, %v627
    %v629 = vrot.slane %v628, 2
    %v630 = vadd.f32 %v628, %v629
    %v631 = vrot.slane %v630, 1
    %v632 = vadd.f32 %v630, %v631
    %v633 = vmul.f32 %v623, 0.0625
    %v634 = vmul.f32 %v632, 0.0625
    %v635 = vmul.f32 %v633, %v633
    %v636 = vsub.f32 %v634, %v635
    %v637 = vmax.f32 %v636, 0.0
    %v638 = vadd.f32 %v637, 1e-05
    %v639 = vrsqrt.pop %v638
    %v640 = vmul.f32 %v57, %v639
    %v641 = vlaneseq
    %v642 = vshrl.u32 %v641, 7
    %v643 = vsub.s32 6, %v642
    %v644 = vrot.slane %v640, %v643
    %v645 = vmul.f32 %v611, %v644
    %v646 = vmul.f32 %v614, %v644
    %v647 = vmul.f32 %v633, %v640
    %v649 = vrot.slane %v647, 7
    %v651 = vsub.f32 %v57, %v649
    %v652 = vlaneseq
    %v653 = vshrl.u32 %v652, 7
    %v654 = vsub.s32 7, %v653
    %v655 = vrot.slane %v651, %v654
    %v656 = vadd.f32 %v645, %v655
    %v657 = vadd.f32 %v646, %v655
    %v658 = vld [vmem:[#allocation5 + $0x100] sm:$0xf]
    %v659 = vld [vmem:[#allocation5 + $0x104] sm:$0xf]
    %v660 = vld [vmem:[#allocation5 + $0x108] sm:$0xf]
    %v661 = vld [vmem:[#allocation5 + $0x10c] sm:$0xf]
    %v662 = vld [vmem:[#allocation5 + $0x110] sm:$0xf]
    %v663 = vld [vmem:[#allocation5 + $0x114] sm:$0xf]
    %v664 = vld [vmem:[#allocation5 + $0x118] sm:$0xf]
    %v665 = vld [vmem:[#allocation5 + $0x11c] sm:$0xf]
    %v666 = vld [vmem:[#allocation5 + $0x120] sm:$0xf]
    %v667 = vld [vmem:[#allocation5 + $0x124] sm:$0xf]
    %v668 = vld [vmem:[#allocation5 + $0x128] sm:$0xf]
    %v669 = vld [vmem:[#allocation5 + $0x12c] sm:$0xf]
    %v670 = vld [vmem:[#allocation5 + $0x130] sm:$0xf]
    %v671 = vld [vmem:[#allocation5 + $0x134] sm:$0xf]
    %v672 = vld [vmem:[#allocation5 + $0x138] sm:$0xf]
    %v673 = vld [vmem:[#allocation5 + $0x13c] sm:$0xf]
    %v690 = vunpack.c.l.b16 %v658
    %v691 = vunpack.c.l.b16 %v659
    %v692 = vunpack.c.l.b16 %v660
    %v693 = vunpack.c.l.b16 %v661
    %v694 = vunpack.c.l.b16 %v662
    %v695 = vunpack.c.l.b16 %v663
    %v696 = vunpack.c.l.b16 %v664
    %v697 = vunpack.c.l.b16 %v665
    %v698 = vunpack.c.l.b16 %v666
    %v699 = vunpack.c.l.b16 %v667
    %v700 = vunpack.c.l.b16 %v668
    %v701 = vunpack.c.l.b16 %v669
    %v702 = vunpack.c.l.b16 %v670
    %v703 = vunpack.c.l.b16 %v671
    %v704 = vunpack.c.l.b16 %v672
    %v705 = vunpack.c.l.b16 %v673
    %v706 = vpack.c.b16 %v691, %v690
    %v707 = vpack.c.b16 %v693, %v692
    %v708 = vpack.c.b16 %v695, %v694
    %v709 = vpack.c.b16 %v697, %v696
    %v710 = vpack.c.b16 %v699, %v698
    %v711 = vpack.c.b16 %v701, %v700
    %v712 = vpack.c.b16 %v703, %v702
    %v713 = vpack.c.b16 %v705, %v704
    %722 = vmatprep.subr.bf16.mxu0 0
    %723 = vmatpush1.bf16.msra.mxu0 %v706
    %724 = vmatprep.subr.bf16.mxu0 0
    %725 = vmatpush1.bf16.msra.mxu0 %v707
    %726 = vmatprep.subr.bf16.mxu0 0
    %727 = vmatpush1.bf16.msra.mxu0 %v708
    %728 = vmatprep.subr.bf16.mxu0 0
    %729 = vmatpush1.bf16.msra.mxu0 %v709
    %730 = vmatprep.subr.bf16.mxu0 0
    %731 = vmatpush1.bf16.msra.mxu0 %v710
    %732 = vmatprep.subr.bf16.mxu0 0
    %733 = vmatpush1.bf16.msra.mxu0 %v711
    %734 = vmatprep.subr.bf16.mxu0 0
    %735 = vmatpush1.bf16.msra.mxu0 %v712
    %736 = vmatprep.subr.bf16.mxu0 0
    %737 = vmatpush1.bf16.msra.mxu0 %v713
    %738 = vmatprep.subr.bf16.mxu0 0
    %739 = vmatpush1.bf16.msra.mxu0 0
    %740 = vmatprep.subr.bf16.mxu0 0
    %741 = vmatpush1.bf16.msra.mxu0 0
    %742 = vmatprep.subr.bf16.mxu0 0
    %743 = vmatpush1.bf16.msra.mxu0 0
    %744 = vmatprep.subr.bf16.mxu0 0
    %745 = vmatpush1.bf16.msra.mxu0 0
    %746 = vmatprep.subr.bf16.mxu0 0
    %747 = vmatpush1.bf16.msra.mxu0 0
    %748 = vmatprep.subr.bf16.mxu0 0
    %749 = vmatpush1.bf16.msra.mxu0 0
    %750 = vmatprep.subr.bf16.mxu0 0
    %751 = vmatpush1.bf16.msra.mxu0 0
    %752 = vmatprep.subr.bf16.mxu0 0
    %753 = vmatpush1.bf16.msra.mxu0 0
    %754 = vmatprep.mubr.bf16.mxu0 0
    %755 = vmatmul.mubr.bf16.gmra.mrb[0].mxu0 %v378
    %v756 = vpop.f32.mrb[0].mxu0
    %v757 = vadd.f32 0.0, %v756
    %v758 = vpop.f32.mrb[0].mxu0
    %v759 = vpop.f32.mrb[0].mxu0
    %v760 = vadd.f32 0.0, %v759
    %v761 = vpop.f32.mrb[0].mxu0
    %762 = vdwg.mxu0
    %v763 = vadd.f32 %v757, %v760
    %v764 = vrot.slane %v763, 4
    %v765 = vadd.f32 %v763, %v764
    %v766 = vrot.slane %v765, 2
    %v767 = vadd.f32 %v765, %v766
    %v768 = vrot.slane %v767, 1
    %v769 = vadd.f32 %v767, %v768
    %v770 = vmul.f32 %v757, %v757
    %v771 = vmul.f32 %v760, %v760
    %v772 = vadd.f32 %v770, %v771
    %v773 = vrot.slane %v772, 4
    %v774 = vadd.f32 %v772, %v773
    %v775 = vrot.slane %v774, 2
    %v776 = vadd.f32 %v774, %v775
    %v777 = vrot.slane %v776, 1
    %v778 = vadd.f32 %v776, %v777
    %v779 = vmul.f32 %v769, 0.0625
    %v780 = vmul.f32 %v778, 0.0625
    %v781 = vmul.f32 %v779, %v779
    %v782 = vsub.f32 %v780, %v781
    %v783 = vmax.f32 %v782, 0.0
    %v784 = vadd.f32 %v783, 1e-05
    %v785 = vrsqrt.pop %v784
    %v786 = vmul.f32 %v58, %v785
    %v787 = vlaneseq
    %v788 = vshrl.u32 %v787, 7
    %v789 = vsub.s32 0, %v788
    %v790 = vrot.slane %v786, %v789
    %v791 = vmul.f32 %v757, %v790
    %v792 = vmul.f32 %v760, %v790
    %v793 = vmul.f32 %v779, %v786
    %v795 = vrot.slane %v793, 7
    %v797 = vsub.f32 %v58, %v795
    %v798 = vlaneseq
    %v799 = vshrl.u32 %v798, 7
    %v800 = vsub.s32 1, %v799
    %v801 = vrot.slane %v797, %v800
    %v802 = vadd.f32 %v791, %v801
    %v803 = vadd.f32 %v792, %v801
    %v804 = vadd.f32 %v656, %v802
    %v805 = vadd.f32 %v657, %v803
    %v806 = vmax.f32 %v804, 0.0
    %v807 = vmax.f32 %v805, 0.0
    %v808 = vld [vmem:[#allocation5 + $0x140] sm:$0xf]
    %v809 = vld [vmem:[#allocation5 + $0x144] sm:$0xf]
    %v810 = vld [vmem:[#allocation5 + $0x148] sm:$0xf]
    %v811 = vld [vmem:[#allocation5 + $0x14c] sm:$0xf]
    %v812 = vld [vmem:[#allocation5 + $0x150] sm:$0xf]
    %v813 = vld [vmem:[#allocation5 + $0x154] sm:$0xf]
    %v814 = vld [vmem:[#allocation5 + $0x158] sm:$0xf]
    %v815 = vld [vmem:[#allocation5 + $0x15c] sm:$0xf]
    %v816 = vld [vmem:[#allocation5 + $0x160] sm:$0xf]
    %v817 = vld [vmem:[#allocation5 + $0x164] sm:$0xf]
    %v818 = vld [vmem:[#allocation5 + $0x168] sm:$0xf]
    %v819 = vld [vmem:[#allocation5 + $0x16c] sm:$0xf]
    %v820 = vld [vmem:[#allocation5 + $0x170] sm:$0xf]
    %v821 = vld [vmem:[#allocation5 + $0x174] sm:$0xf]
    %v822 = vld [vmem:[#allocation5 + $0x178] sm:$0xf]
    %v823 = vld [vmem:[#allocation5 + $0x17c] sm:$0xf]
    %v824 = vpack.c.bf16 %v807, %v806
    %v841 = vunpack.c.l.b16 %v808
    %v842 = vunpack.c.l.b16 %v809
    %v843 = vunpack.c.l.b16 %v810
    %v844 = vunpack.c.l.b16 %v811
    %v845 = vunpack.c.l.b16 %v812
    %v846 = vunpack.c.l.b16 %v813
    %v847 = vunpack.c.l.b16 %v814
    %v848 = vunpack.c.l.b16 %v815
    %v849 = vunpack.c.l.b16 %v816
    %v850 = vunpack.c.l.b16 %v817
    %v851 = vunpack.c.l.b16 %v818
    %v852 = vunpack.c.l.b16 %v819
    %v853 = vunpack.c.l.b16 %v820
    %v854 = vunpack.c.l.b16 %v821
    %v855 = vunpack.c.l.b16 %v822
    %v856 = vunpack.c.l.b16 %v823
    %v857 = vpack.c.b16 %v842, %v841
    %v858 = vpack.c.b16 %v844, %v843
    %v859 = vpack.c.b16 %v846, %v845
    %v860 = vpack.c.b16 %v848, %v847
    %v861 = vpack.c.b16 %v850, %v849
    %v862 = vpack.c.b16 %v852, %v851
    %v863 = vpack.c.b16 %v854, %v853
    %v864 = vpack.c.b16 %v856, %v855
    %873 = vmatprep.subr.bf16.mxu0 0
    %874 = vmatpush1.bf16.msra.mxu0 %v857
    %875 = vmatprep.subr.bf16.mxu0 0
    %876 = vmatpush1.bf16.msra.mxu0 %v858
    %877 = vmatprep.subr.bf16.mxu0 0
    %878 = vmatpush1.bf16.msra.mxu0 %v859
    %879 = vmatprep.subr.bf16.mxu0 0
    %880 = vmatpush1.bf16.msra.mxu0 %v860
    %881 = vmatprep.subr.bf16.mxu0 0
    %882 = vmatpush1.bf16.msra.mxu0 %v861
    %883 = vmatprep.subr.bf16.mxu0 0
    %884 = vmatpush1.bf16.msra.mxu0 %v862
    %885 = vmatprep.subr.bf16.mxu0 0
    %886 = vmatpush1.bf16.msra.mxu0 %v863
    %887 = vmatprep.subr.bf16.mxu0 0
    %888 = vmatpush1.bf16.msra.mxu0 %v864
    %889 = vmatprep.subr.bf16.mxu0 0
    %890 = vmatpush1.bf16.msra.mxu0 0
    %891 = vmatprep.subr.bf16.mxu0 0
    %892 = vmatpush1.bf16.msra.mxu0 0
    %893 = vmatprep.subr.bf16.mxu0 0
    %894 = vmatpush1.bf16.msra.mxu0 0
    %895 = vmatprep.subr.bf16.mxu0 0
    %896 = vmatpush1.bf16.msra.mxu0 0
    %897 = vmatprep.subr.bf16.mxu0 0
    %898 = vmatpush1.bf16.msra.mxu0 0
    %899 = vmatprep.subr.bf16.mxu0 0
    %900 = vmatpush1.bf16.msra.mxu0 0
    %901 = vmatprep.subr.bf16.mxu0 0
    %902 = vmatpush1.bf16.msra.mxu0 0
    %903 = vmatprep.subr.bf16.mxu0 0
    %904 = vmatpush1.bf16.msra.mxu0 0
    %905 = vmatprep.mubr.bf16.mxu0 0
    %906 = vmatmul.mubr.bf16.gmra.mrb[0].mxu0 %v824
    %v907 = vpop.f32.mrb[0].mxu0
    %v908 = vadd.f32 0.0, %v907
    %v909 = vpop.f32.mrb[0].mxu0
    %v910 = vpop.f32.mrb[0].mxu0
    %v911 = vadd.f32 0.0, %v910
    %v912 = vpop.f32.mrb[0].mxu0
    %913 = vdwg.mxu0
    %v914 = vadd.f32 %v908, %v911
    %v915 = vrot.slane %v914, 4
    %v916 = vadd.f32 %v914, %v915
    %v917 = vrot.slane %v916, 2
    %v918 = vadd.f32 %v916, %v917
    %v919 = vrot.slane %v918, 1
    %v920 = vadd.f32 %v918, %v919
    %v921 = vmul.f32 %v908, %v908
    %v922 = vmul.f32 %v911, %v911
    %v923 = vadd.f32 %v921, %v922
    %v924 = vrot.slane %v923, 4
    %v925 = vadd.f32 %v923, %v924
    %v926 = vrot.slane %v925, 2
    %v927 = vadd.f32 %v925, %v926
    %v928 = vrot.slane %v927, 1
    %v929 = vadd.f32 %v927, %v928
    %v930 = vmul.f32 %v920, 0.0625
    %v931 = vmul.f32 %v929, 0.0625
    %v932 = vmul.f32 %v930, %v930
    %v933 = vsub.f32 %v931, %v932
    %v934 = vmax.f32 %v933, 0.0
    %v935 = vadd.f32 %v934, 1e-05
    %v936 = vrsqrt.pop %v935
    %v937 = vmul.f32 %v58, %v936
    %v938 = vlaneseq
    %v939 = vshrl.u32 %v938, 7
    %v940 = vsub.s32 2, %v939
    %v941 = vrot.slane %v937, %v940
    %v942 = vmul.f32 %v908, %v941
    %v943 = vmul.f32 %v911, %v941
    %v944 = vmul.f32 %v930, %v937
    %v946 = vrot.slane %v944, 7
    %v948 = vsub.f32 %v58, %v946
    %v949 = vlaneseq
    %v950 = vshrl.u32 %v949, 7
    %v951 = vsub.s32 3, %v950
    %v952 = vrot.slane %v948, %v951
    %v953 = vadd.f32 %v942, %v952
    %v954 = vadd.f32 %v943, %v952
    %v955 = vmax.f32 %v953, 0.0
    %v956 = vmax.f32 %v954, 0.0
    %v957 = vld [vmem:[#allocation5 + $0x180] sm:$0xf]
    %v958 = vld [vmem:[#allocation5 + $0x184] sm:$0xf]
    %v959 = vld [vmem:[#allocation5 + $0x188] sm:$0xf]
    %v960 = vld [vmem:[#allocation5 + $0x18c] sm:$0xf]
    %v961 = vld [vmem:[#allocation5 + $0x190] sm:$0xf]
    %v962 = vld [vmem:[#allocation5 + $0x194] sm:$0xf]
    %v963 = vld [vmem:[#allocation5 + $0x198] sm:$0xf]
    %v964 = vld [vmem:[#allocation5 + $0x19c] sm:$0xf]
    %v965 = vld [vmem:[#allocation5 + $0x1a0] sm:$0xf]
    %v966 = vld [vmem:[#allocation5 + $0x1a4] sm:$0xf]
    %v967 = vld [vmem:[#allocation5 + $0x1a8] sm:$0xf]
    %v968 = vld [vmem:[#allocation5 + $0x1ac] sm:$0xf]
    %v969 = vld [vmem:[#allocation5 + $0x1b0] sm:$0xf]
    %v970 = vld [vmem:[#allocation5 + $0x1b4] sm:$0xf]
    %v971 = vld [vmem:[#allocation5 + $0x1b8] sm:$0xf]
    %v972 = vld [vmem:[#allocation5 + $0x1bc] sm:$0xf]
    %v973 = vpack.c.bf16 %v956, %v955
    %v990 = vunpack.c.l.b16 %v957
    %v991 = vunpack.c.l.b16 %v958
    %v992 = vunpack.c.l.b16 %v959
    %v993 = vunpack.c.l.b16 %v960
    %v994 = vunpack.c.l.b16 %v961
    %v995 = vunpack.c.l.b16 %v962
    %v996 = vunpack.c.l.b16 %v963
    %v997 = vunpack.c.l.b16 %v964
    %v998 = vunpack.c.l.b16 %v965
    %v999 = vunpack.c.l.b16 %v966
    %v1000 = vunpack.c.l.b16 %v967
    %v1001 = vunpack.c.l.b16 %v968
    %v1002 = vunpack.c.l.b16 %v969
    %v1003 = vunpack.c.l.b16 %v970
    %v1004 = vunpack.c.l.b16 %v971
    %v1005 = vunpack.c.l.b16 %v972
    %v1006 = vpack.c.b16 %v991, %v990
    %v1007 = vpack.c.b16 %v993, %v992
    %v1008 = vpack.c.b16 %v995, %v994
    %v1009 = vpack.c.b16 %v997, %v996
    %v1010 = vpack.c.b16 %v999, %v998
    %v1011 = vpack.c.b16 %v1001, %v1000
    %v1012 = vpack.c.b16 %v1003, %v1002
    %v1013 = vpack.c.b16 %v1005, %v1004
    %1022 = vmatprep.subr.bf16.mxu0 0
    %1023 = vmatpush1.bf16.msra.mxu0 %v1006
    %1024 = vmatprep.subr.bf16.mxu0 0
    %1025 = vmatpush1.bf16.msra.mxu0 %v1007
    %1026 = vmatprep.subr.bf16.mxu0 0
    %1027 = vmatpush1.bf16.msra.mxu0 %v1008
    %1028 = vmatprep.subr.bf16.mxu0 0
    %1029 = vmatpush1.bf16.msra.mxu0 %v1009
    %1030 = vmatprep.subr.bf16.mxu0 0
    %1031 = vmatpush1.bf16.msra.mxu0 %v1010
    %1032 = vmatprep.subr.bf16.mxu0 0
    %1033 = vmatpush1.bf16.msra.mxu0 %v1011
    %1034 = vmatprep.subr.bf16.mxu0 0
    %1035 = vmatpush1.bf16.msra.mxu0 %v1012
    %1036 = vmatprep.subr.bf16.mxu0 0
    %1037 = vmatpush1.bf16.msra.mxu0 %v1013
    %1038 = vmatprep.subr.bf16.mxu0 0
    %1039 = vmatpush1.bf16.msra.mxu0 0
    %1040 = vmatprep.subr.bf16.mxu0 0
    %1041 = vmatpush1.bf16.msra.mxu0 0
    %1042 = vmatprep.subr.bf16.mxu0 0
    %1043 = vmatpush1.bf16.msra.mxu0 0
    %1044 = vmatprep.subr.bf16.mxu0 0
    %1045 = vmatpush1.bf16.msra.mxu0 0
    %1046 = vmatprep.subr.bf16.mxu0 0
    %1047 = vmatpush1.bf16.msra.mxu0 0
    %1048 = vmatprep.subr.bf16.mxu0 0
    %1049 = vmatpush1.bf16.msra.mxu0 0
    %1050 = vmatprep.subr.bf16.mxu0 0
    %1051 = vmatpush1.bf16.msra.mxu0 0
    %1052 = vmatprep.subr.bf16.mxu0 0
    %1053 = vmatpush1.bf16.msra.mxu0 0
    %1054 = vmatprep.mubr.bf16.mxu0 0
    %1055 = vmatmul.mubr.bf16.gmra.mrb[0].mxu0 %v973
    %v1056 = vpop.f32.mrb[0].mxu0
    %v1057 = vadd.f32 0.0, %v1056
    %v1058 = vpop.f32.mrb[0].mxu0
    %v1059 = vpop.f32.mrb[0].mxu0
    %v1060 = vadd.f32 0.0, %v1059
    %v1061 = vpop.f32.mrb[0].mxu0
    %1062 = vdwg.mxu0
    %v1063 = vadd.f32 %v1057, %v1060
    %v1064 = vrot.slane %v1063, 4
    %v1065 = vadd.f32 %v1063, %v1064
    %v1066 = vrot.slane %v1065, 2
    %v1067 = vadd.f32 %v1065, %v1066
    %v1068 = vrot.slane %v1067, 1
    %v1069 = vadd.f32 %v1067, %v1068
    %v1070 = vmul.f32 %v1057, %v1057
    %v1071 = vmul.f32 %v1060, %v1060
    %v1072 = vadd.f32 %v1070, %v1071
    %v1073 = vrot.slane %v1072, 4
    %v1074 = vadd.f32 %v1072, %v1073
    %v1075 = vrot.slane %v1074, 2
    %v1076 = vadd.f32 %v1074, %v1075
    %v1077 = vrot.slane %v1076, 1
    %v1078 = vadd.f32 %v1076, %v1077
    %v1079 = vmul.f32 %v1069, 0.0625
    %v1080 = vmul.f32 %v1078, 0.0625
    %v1081 = vmul.f32 %v1079, %v1079
    %v1082 = vsub.f32 %v1080, %v1081
    %v1083 = vmax.f32 %v1082, 0.0
    %v1084 = vadd.f32 %v1083, 1e-05
    %v1085 = vrsqrt.pop %v1084
    %v1086 = vmul.f32 %v58, %v1085
    %v1087 = vlaneseq
    %v1088 = vshrl.u32 %v1087, 7
    %v1089 = vsub.s32 4, %v1088
    %v1090 = vrot.slane %v1086, %v1089
    %v1091 = vmul.f32 %v1057, %v1090
    %v1092 = vmul.f32 %v1060, %v1090
    %v1093 = vmul.f32 %v1079, %v1086
    %v1095 = vrot.slane %v1093, 7
    %v1097 = vsub.f32 %v58, %v1095
    %v1098 = vlaneseq
    %v1099 = vshrl.u32 %v1098, 7
    %v1100 = vsub.s32 5, %v1099
    %v1101 = vrot.slane %v1097, %v1100
    %v1102 = vadd.f32 %v1091, %v1101
    %v1103 = vadd.f32 %v1092, %v1101
    %v1104 = vld [vmem:[#allocation5 + $0x1c0] sm:$0xf]
    %v1105 = vld [vmem:[#allocation5 + $0x1c4] sm:$0xf]
    %v1106 = vld [vmem:[#allocation5 + $0x1c8] sm:$0xf]
    %v1107 = vld [vmem:[#allocation5 + $0x1cc] sm:$0xf]
    %v1108 = vld [vmem:[#allocation5 + $0x1d0] sm:$0xf]
    %v1109 = vld [vmem:[#allocation5 + $0x1d4] sm:$0xf]
    %v1110 = vld [vmem:[#allocation5 + $0x1d8] sm:$0xf]
    %v1111 = vld [vmem:[#allocation5 + $0x1dc] sm:$0xf]
    %v1112 = vld [vmem:[#allocation5 + $0x1e0] sm:$0xf]
    %v1113 = vld [vmem:[#allocation5 + $0x1e4] sm:$0xf]
    %v1114 = vld [vmem:[#allocation5 + $0x1e8] sm:$0xf]
    %v1115 = vld [vmem:[#allocation5 + $0x1ec] sm:$0xf]
    %v1116 = vld [vmem:[#allocation5 + $0x1f0] sm:$0xf]
    %v1117 = vld [vmem:[#allocation5 + $0x1f4] sm:$0xf]
    %v1118 = vld [vmem:[#allocation5 + $0x1f8] sm:$0xf]
    %v1119 = vld [vmem:[#allocation5 + $0x1fc] sm:$0xf]
    %v1136 = vunpack.c.l.b16 %v1104
    %v1137 = vunpack.c.l.b16 %v1105
    %v1138 = vunpack.c.l.b16 %v1106
    %v1139 = vunpack.c.l.b16 %v1107
    %v1140 = vunpack.c.l.b16 %v1108
    %v1141 = vunpack.c.l.b16 %v1109
    %v1142 = vunpack.c.l.b16 %v1110
    %v1143 = vunpack.c.l.b16 %v1111
    %v1144 = vunpack.c.l.b16 %v1112
    %v1145 = vunpack.c.l.b16 %v1113
    %v1146 = vunpack.c.l.b16 %v1114
    %v1147 = vunpack.c.l.b16 %v1115
    %v1148 = vunpack.c.l.b16 %v1116
    %v1149 = vunpack.c.l.b16 %v1117
    %v1150 = vunpack.c.l.b16 %v1118
    %v1151 = vunpack.c.l.b16 %v1119
    %v1152 = vpack.c.b16 %v1137, %v1136
    %v1153 = vpack.c.b16 %v1139, %v1138
    %v1154 = vpack.c.b16 %v1141, %v1140
    %v1155 = vpack.c.b16 %v1143, %v1142
    %v1156 = vpack.c.b16 %v1145, %v1144
    %v1157 = vpack.c.b16 %v1147, %v1146
    %v1158 = vpack.c.b16 %v1149, %v1148
    %v1159 = vpack.c.b16 %v1151, %v1150
    %1168 = vmatprep.subr.bf16.mxu0 0
    %1169 = vmatpush1.bf16.msra.mxu0 %v1152
    %1170 = vmatprep.subr.bf16.mxu0 0
    %1171 = vmatpush1.bf16.msra.mxu0 %v1153
    %1172 = vmatprep.subr.bf16.mxu0 0
    %1173 = vmatpush1.bf16.msra.mxu0 %v1154
    %1174 = vmatprep.subr.bf16.mxu0 0
    %1175 = vmatpush1.bf16.msra.mxu0 %v1155
    %1176 = vmatprep.subr.bf16.mxu0 0
    %1177 = vmatpush1.bf16.msra.mxu0 %v1156
    %1178 = vmatprep.subr.bf16.mxu0 0
    %1179 = vmatpush1.bf16.msra.mxu0 %v1157
    %1180 = vmatprep.subr.bf16.mxu0 0
    %1181 = vmatpush1.bf16.msra.mxu0 %v1158
    %1182 = vmatprep.subr.bf16.mxu0 0
    %1183 = vmatpush1.bf16.msra.mxu0 %v1159
    %1184 = vmatprep.subr.bf16.mxu0 0
    %1185 = vmatpush1.bf16.msra.mxu0 0
    %1186 = vmatprep.subr.bf16.mxu0 0
    %1187 = vmatpush1.bf16.msra.mxu0 0
    %1188 = vmatprep.subr.bf16.mxu0 0
    %1189 = vmatpush1.bf16.msra.mxu0 0
    %1190 = vmatprep.subr.bf16.mxu0 0
    %1191 = vmatpush1.bf16.msra.mxu0 0
    %1192 = vmatprep.subr.bf16.mxu0 0
    %1193 = vmatpush1.bf16.msra.mxu0 0
    %1194 = vmatprep.subr.bf16.mxu0 0
    %1195 = vmatpush1.bf16.msra.mxu0 0
    %1196 = vmatprep.subr.bf16.mxu0 0
    %1197 = vmatpush1.bf16.msra.mxu0 0
    %1198 = vmatprep.subr.bf16.mxu0 0
    %1199 = vmatpush1.bf16.msra.mxu0 0
    %1200 = vmatprep.mubr.bf16.mxu0 0
    %1201 = vmatmul.mubr.bf16.gmra.mrb[0].mxu0 %v824
    %v1202 = vpop.f32.mrb[0].mxu0
    %v1203 = vadd.f32 0.0, %v1202
    %v1204 = vpop.f32.mrb[0].mxu0
    %v1205 = vpop.f32.mrb[0].mxu0
    %v1206 = vadd.f32 0.0, %v1205
    %v1207 = vpop.f32.mrb[0].mxu0
    %1208 = vdwg.mxu0
    %v1209 = vadd.f32 %v1203, %v1206
    %v1210 = vrot.slane %v1209, 4
    %v1211 = vadd.f32 %v1209, %v1210
    %v1212 = vrot.slane %v1211, 2
    %v1213 = vadd.f32 %v1211, %v1212
    %v1214 = vrot.slane %v1213, 1
    %v1215 = vadd.f32 %v1213, %v1214
    %v1216 = vmul.f32 %v1203, %v1203
    %v1217 = vmul.f32 %v1206, %v1206
    %v1218 = vadd.f32 %v1216, %v1217
    %v1219 = vrot.slane %v1218, 4
    %v1220 = vadd.f32 %v1218, %v1219
    %v1221 = vrot.slane %v1220, 2
    %v1222 = vadd.f32 %v1220, %v1221
    %v1223 = vrot.slane %v1222, 1
    %v1224 = vadd.f32 %v1222, %v1223
    %v1225 = vmul.f32 %v1215, 0.0625
    %v1226 = vmul.f32 %v1224, 0.0625
    %v1227 = vmul.f32 %v1225, %v1225
    %v1228 = vsub.f32 %v1226, %v1227
    %v1229 = vmax.f32 %v1228, 0.0
    %v1230 = vadd.f32 %v1229, 1e-05
    %v1231 = vrsqrt.pop %v1230
    %v1232 = vmul.f32 %v58, %v1231
    %v1233 = vlaneseq
    %v1234 = vshrl.u32 %v1233, 7
    %v1235 = vsub.s32 6, %v1234
    %v1236 = vrot.slane %v1232, %v1235
    %v1237 = vmul.f32 %v1203, %v1236
    %v1238 = vmul.f32 %v1206, %v1236
    %v1239 = vmul.f32 %v1225, %v1232
    %v1241 = vrot.slane %v1239, 7
    %v1243 = vsub.f32 %v58, %v1241
    %v1244 = vlaneseq
    %v1245 = vshrl.u32 %v1244, 7
    %v1246 = vsub.s32 7, %v1245
    %v1247 = vrot.slane %v1243, %v1246
    %v1248 = vadd.f32 %v1237, %v1247
    %v1249 = vadd.f32 %v1238, %v1247
    %v1250 = vadd.f32 %v1102, %v1248
    %v1251 = vadd.f32 %v1103, %v1249
    %v1252 = vmax.f32 %v1250, 0.0
    %v1253 = vmax.f32 %v1251, 0.0
    %v1254 = vld [vmem:[#allocation5 + $0x200] sm:$0xf]
    %v1255 = vld [vmem:[#allocation5 + $0x204] sm:$0xf]
    %v1256 = vld [vmem:[#allocation5 + $0x208] sm:$0xf]
    %v1257 = vld [vmem:[#allocation5 + $0x20c] sm:$0xf]
    %v1258 = vld [vmem:[#allocation5 + $0x210] sm:$0xf]
    %v1259 = vld [vmem:[#allocation5 + $0x214] sm:$0xf]
    %v1260 = vld [vmem:[#allocation5 + $0x218] sm:$0xf]
    %v1261 = vld [vmem:[#allocation5 + $0x21c] sm:$0xf]
    %v1262 = vld [vmem:[#allocation5 + $0x220] sm:$0xf]
    %v1263 = vld [vmem:[#allocation5 + $0x224] sm:$0xf]
    %v1264 = vld [vmem:[#allocation5 + $0x228] sm:$0xf]
    %v1265 = vld [vmem:[#allocation5 + $0x22c] sm:$0xf]
    %v1266 = vld [vmem:[#allocation5 + $0x230] sm:$0xf]
    %v1267 = vld [vmem:[#allocation5 + $0x234] sm:$0xf]
    %v1268 = vld [vmem:[#allocation5 + $0x238] sm:$0xf]
    %v1269 = vld [vmem:[#allocation5 + $0x23c] sm:$0xf]
    %v1270 = vpack.c.bf16 %v1253, %v1252
    %v1271 = vlaneseq
    %v1272 = vshrl.u32 %v1271, 7
    %v1273 = vsub.s32 0, %v1272
    %v1274 = vrot.slane %v59, %v1273
    %v1291 = vunpack.c.l.b16 %v1254
    %v1292 = vunpack.c.l.b16 %v1255
    %v1293 = vunpack.c.l.b16 %v1256
    %v1294 = vunpack.c.l.b16 %v1257
    %v1295 = vunpack.c.l.b16 %v1258
    %v1296 = vunpack.c.l.b16 %v1259
    %v1297 = vunpack.c.l.b16 %v1260
    %v1298 = vunpack.c.l.b16 %v1261
    %v1299 = vunpack.c.l.b16 %v1262
    %v1300 = vunpack.c.l.b16 %v1263
    %v1301 = vunpack.c.l.b16 %v1264
    %v1302 = vunpack.c.l.b16 %v1265
    %v1303 = vunpack.c.l.b16 %v1266
    %v1304 = vunpack.c.l.b16 %v1267
    %v1305 = vunpack.c.l.b16 %v1268
    %v1306 = vunpack.c.l.b16 %v1269
    %v1307 = vpack.c.b16 %v1292, %v1291
    %v1308 = vpack.c.b16 %v1294, %v1293
    %v1309 = vpack.c.b16 %v1296, %v1295
    %v1310 = vpack.c.b16 %v1298, %v1297
    %v1311 = vpack.c.b16 %v1300, %v1299
    %v1312 = vpack.c.b16 %v1302, %v1301
    %v1313 = vpack.c.b16 %v1304, %v1303
    %v1314 = vpack.c.b16 %v1306, %v1305
    %1323 = vmatprep.subr.bf16.mxu0 0
    %1324 = vmatpush1.bf16.msra.mxu0 %v1307
    %1325 = vmatprep.subr.bf16.mxu0 0
    %1326 = vmatpush1.bf16.msra.mxu0 %v1308
    %1327 = vmatprep.subr.bf16.mxu0 0
    %1328 = vmatpush1.bf16.msra.mxu0 %v1309
    %1329 = vmatprep.subr.bf16.mxu0 0
    %1330 = vmatpush1.bf16.msra.mxu0 %v1310
    %1331 = vmatprep.subr.bf16.mxu0 0
    %1332 = vmatpush1.bf16.msra.mxu0 %v1311
    %1333 = vmatprep.subr.bf16.mxu0 0
    %1334 = vmatpush1.bf16.msra.mxu0 %v1312
    %1335 = vmatprep.subr.bf16.mxu0 0
    %1336 = vmatpush1.bf16.msra.mxu0 %v1313
    %1337 = vmatprep.subr.bf16.mxu0 0
    %1338 = vmatpush1.bf16.msra.mxu0 %v1314
    %1339 = vmatprep.subr.bf16.mxu0 0
    %1340 = vmatpush1.bf16.msra.mxu0 0
    %1341 = vmatprep.subr.bf16.mxu0 0
    %1342 = vmatpush1.bf16.msra.mxu0 0
    %1343 = vmatprep.subr.bf16.mxu0 0
    %1344 = vmatpush1.bf16.msra.mxu0 0
    %1345 = vmatprep.subr.bf16.mxu0 0
    %1346 = vmatpush1.bf16.msra.mxu0 0
    %1347 = vmatprep.subr.bf16.mxu0 0
    %1348 = vmatpush1.bf16.msra.mxu0 0
    %1349 = vmatprep.subr.bf16.mxu0 0
    %1350 = vmatpush1.bf16.msra.mxu0 0
    %1351 = vmatprep.subr.bf16.mxu0 0
    %1352 = vmatpush1.bf16.msra.mxu0 0
    %1353 = vmatprep.subr.bf16.mxu0 0
    %1354 = vmatpush1.bf16.msra.mxu0 0
    %1355 = vmatprep.mubr.bf16.mxu0 0
    %1356 = vmatmul.mubr.bf16.gmra.mrb[0].mxu0 %v1270
    %v1357 = vpop.f32.mrb[0].mxu0
    %v1358 = vadd.f32 %v1274, %v1357
    %v1359 = vpop.f32.mrb[0].mxu0
    %v1360 = vpop.f32.mrb[0].mxu0
    %v1361 = vadd.f32 %v1274, %v1360
    %v1362 = vpop.f32.mrb[0].mxu0
    %1363 = vdwg.mxu0
    %1364 = vst [vmem:[#allocation8] sm:$0xff] %v1358
    %1365 = vst [vmem:[#allocation8 + $0x8] sm:$0xff] %v1361
    // Predicated region
    $region26: #{tpu_custom_call.1} parent=1 // pred_check
      _
    $region27: #{tpu_custom_call.1} parent=1 // pred_check_branch
      %1367 = sbr.rel (0) target = $region29
    $region28: #{tpu_custom_call.1} parent=1 // pred_region
      %s1369 = ssub.s32 256, 256
      %1370 = vsyncadd [#allocation4], %s1369
      %s1371 = sshll.u32 [#allocation8], 4
      %s1372 = int_to_ptr.vmem [resolvable:$true] %s1371
      %1377 = dma.vmem_to_hbm [thread:$0]  %s1372, 256, %s3, [#allocation4], 128, 128, 8
    $region29: #{tpu_custom_call.1} parent=1 // pred_fallthru
      _
    // Predicated region
    $region30: #{tpu_custom_call.1} parent=1 // pred_check
      _
    $region31: #{tpu_custom_call.1} parent=1 // pred_check_branch
      %1379 = sbr.rel (0) target = $region33
    $region32: #{tpu_custom_call.1} parent=1 // pred_region
      %1380 = dma.done [#allocation4], 256
    $region33: #{tpu_custom_call.1} parent=1 // pred_fallthru
      _
    %1381 = vsyncpa [#allocation3], 1
    %1382 = vsyncpa [#allocation6], 1
    %1383 = vsyncpa [#allocation4], 1

</llo_original>
